<compile_context>
chip_gen: v7x
topology: tpu7x:2x2x1
jax: 0.10.0
libtpu: 0.0.40
codegen_flags: <defaults>
</compile_context>

<pallas_src>
import functools
import math

import jax
import jax.numpy as jnp
from jax import lax
from jax.experimental import pallas as pl
from jax.experimental.pallas import tpu as pltpu


def _layernorm(x, gamma, beta, eps=1e-5):
    # PyTorch nn.LayerNorm: biased variance over the last dim, eps=1e-5.
    mu = jnp.mean(x, axis=-1, keepdims=True)
    var = jnp.mean((x - mu) ** 2, axis=-1, keepdims=True)
    return (x - mu) * lax.rsqrt(var + eps) * gamma + beta


def _gelu(x):
    # GPT-2 "gelu_new" (tanh approximation).
    # TODO(synk): switch to exact erf-GELU if the target config uses nn.GELU() exact.
    c = math.sqrt(2.0 / math.pi)
    return 0.5 * x * (1.0 + jnp.tanh(c * (x + 0.044715 * x * x * x)))


def block_kernel(n_head, mxu_dtype,
                 x_ref,
                 ln1_g_ref, ln1_b_ref,
                 w_attn_ref, b_attn_ref, w_ap_ref, b_ap_ref,
                 ln2_g_ref, ln2_b_ref,
                 w_fc_ref, b_fc_ref, w_mp_ref, b_mp_ref,
                 o_ref,
                 k_s, v_s):
    Tq, C = x_ref.shape[1], x_ref.shape[2]
    H = n_head
    D = C // H
    scale = 1.0 / math.sqrt(D)
    qi = pl.program_id(1)
    q_start = pl.multiple_of(qi * Tq, Tq)

    def mxu(a, b):
        # MXU matmul: always f32 accumulation; optionally bf16 operands.
        if mxu_dtype is not None:
            a = a.astype(mxu_dtype)
            b = b.astype(mxu_dtype)
        return jnp.dot(a, b, preferred_element_type=jnp.float32)

    # ---- LN1 + QKV projection for this block's rows only (incremental fill).
    x_blk = x_ref[0].astype(jnp.float32)                          # (Tq, C)
    h1 = _layernorm(x_blk, ln1_g_ref[...], ln1_b_ref[...])
    qkv = mxu(h1, w_attn_ref[...]) + b_attn_ref[...]              # (Tq, 3C) f32

    # Append k/v for these rows to the per-batch caches; every kv block <= qi
    # was cached by an earlier (sequential) q iteration of the same batch elem.
    for h in range(H):                                            # static slices
        k_s[h, pl.ds(q_start, Tq), :] = (
            qkv[:, C + h * D:C + (h + 1) * D].astype(k_s.dtype))
        v_s[h, pl.ds(q_start, Tq), :] = (
            qkv[:, 2 * C + h * D:2 * C + (h + 1) * D].astype(v_s.dtype))

    # q for this block, head-batched (H, Tq, D); 1/sqrt(D) folded in once here
    # instead of scaling the (H, Tq, Tq) scores in the kv loop.
    q3 = jnp.stack([qkv[:, h * D:(h + 1) * D] for h in range(H)], axis=0) * scale
    if mxu_dtype is not None:
        q3 = q3.astype(mxu_dtype)

    # ---- flash attention over cached kv blocks (online softmax, deferred norm).
    def attend(k_start, m_i, l_i, acc, mask):
        k3 = k_s[:, pl.ds(k_start, Tq), :]                        # (H, Tq, D)
        v3 = v_s[:, pl.ds(k_start, Tq), :]
        s = jnp.einsum('hqd,hkd->hqk', q3, k3,
                       preferred_element_type=jnp.float32)
        if mask is not None:
            s = jnp.where(mask, s, jnp.float32(-1e30))
        m_new = jnp.maximum(m_i, jnp.max(s, axis=-1, keepdims=True))
        alpha = jnp.exp(m_i - m_new)
        p = jnp.exp(s - m_new)                                    # unnormalized
        l_new = alpha * l_i + jnp.sum(p, axis=-1, keepdims=True)
        pv = jnp.einsum('hqk,hkd->hqd', p.astype(v3.dtype), v3,
                        preferred_element_type=jnp.float32)
        return m_new, l_new, alpha * acc + pv

    def kv_step(kv, carry):
        # Strictly-below-diagonal blocks: fully unmasked (no iota / select).
        m_i, l_i, acc = carry
        return attend(pl.multiple_of(kv * Tq, Tq), m_i, l_i, acc, None)

    m0 = jnp.full((H, Tq, 1), -1e30, jnp.float32)
    l0 = jnp.zeros((H, Tq, 1), jnp.float32)
    a0 = jnp.zeros((H, Tq, D), jnp.float32)
    m_i, l_i, acc = lax.fori_loop(0, qi, kv_step, (m0, l0, a0))

    # Diagonal block: the only one needing a causal mask (block-local indices,
    # iota hoisted out of the kv loop entirely).
    causal = (lax.broadcasted_iota(jnp.int32, (Tq, Tq), 0)
              >= lax.broadcasted_iota(jnp.int32, (Tq, Tq), 1))[None]
    _, l_f, acc_f = attend(q_start, m_i, l_i, acc, causal)

    if mxu_dtype is None:
        heads = acc_f / l_f                                  # exact f32 path
    else:
        heads = acc_f * pl.reciprocal(l_f, approx=True)      # EUP slot

    # Merge heads into one lane-dense (Tq, C) value fed straight into the
    # output projection (no per-head masked column stores / attn scratch).
    attn = jnp.concatenate([heads[h] for h in range(H)], axis=-1)

    # ---- residual + output projection + LN2 + MLP for this row block ----
    x1 = x_blk + mxu(attn, w_ap_ref[...]) + b_ap_ref[...]
    h2 = _layernorm(x1, ln2_g_ref[...], ln2_b_ref[...])
    f = _gelu(mxu(h2, w_fc_ref[...]) + b_fc_ref[...])
    x2 = x1 + mxu(f, w_mp_ref[...]) + b_mp_ref[...]
    o_ref[0] = x2.astype(o_ref.dtype)


def _ceil_to(n, m):
    return -(-n // m) * m


def _vmem_capacity_bytes():
    try:
        return int(pltpu.get_tpu_info().vmem_capacity_bytes)
    except Exception:
        return 64 * 1024 * 1024          # v7x per-TensorCore: most conservative


def _pick_block_q(T, vmem_cap):
    # 512 on large-VMEM parts (v5e/v6e: 128 MiB) halves grid-step overhead and
    # feeds the MXU a larger M; keep 256 on v7x (64 MiB per TensorCore).
    target = 512 if vmem_cap >= 96 * 1024 * 1024 else 256
    bq = min(T, target)
    while T % bq:
        bq //= 2
    return max(bq, 1)


def _vmem_limit_bytes(T, C, n_head, block_q, mxu_dtype, vmem_cap):
    D = C // n_head
    w_item = 2 if mxu_dtype is not None else 4
    lane = lambda n: _ceil_to(n, 128)
    # Single-buffered matmul weights + f32 LN params / biases.
    weights = (3 * C * C + C * C + 4 * C * C + 4 * C * C) * w_item + 16 * C * 4
    # Double-buffered (1, block_q, C) x block and output block (f32).
    io = 2 * 2 * block_q * lane(C) * 4
    # k/v caches (H, T, D): budget the D<128 lane pad (2x when D == 64).
    caches = 2 * n_head * _ceil_to(T, 16) * lane(D) * w_item
    # f32 in-kernel temporaries: qkv, scores+p, softmax stats/acc, merged heads,
    # x1/h2, MLP hidden.
    tmp = (block_q * lane(3 * C)
           + 2 * n_head * block_q * lane(block_q)
           + 2 * n_head * block_q * lane(D)
           + 4 * block_q * lane(C)
           + block_q * lane(4 * C)) * 4
    est = weights + io + caches + tmp
    limit = int(1.5 * est) + (8 << 20)            # headroom for compiler scratch
    limit = min(limit, vmem_cap - (8 << 20))      # never request all of VMEM
    return max(min(limit, vmem_cap), 32 << 20)


def gpt2_block(x, params, n_head, block_q=None, mxu_dtype=jnp.bfloat16):
    B, T, C = x.shape
    assert C % n_head == 0
    D = C // n_head

    vmem_cap = _vmem_capacity_bytes()
    if block_q is None:
        block_q = _pick_block_q(T, vmem_cap)
    assert T % block_q == 0
    # bf16 caches pack 2 rows per sublane -> 16-row alignment unless the block
    # covers the whole sequence.
    assert block_q == T or block_q % (16 if mxu_dtype is not None else 8) == 0
    num_q = T // block_q

    weight_order = ("ln1_g", "ln1_b",
                    "w_attn", "b_attn", "w_aproj", "b_aproj",
                    "ln2_g", "ln2_b",
                    "w_fc", "b_fc", "w_mproj", "b_mproj")
    mm_weights = ("w_attn", "w_aproj", "w_fc", "w_mproj")

    def maybe_cast(name, w):
        # bf16 matmul weights halve VMEM/HBM traffic and run at full MXU rate;
        # LN params and biases stay f32 (all elementwise math stays f32).
        if mxu_dtype is not None and name in mm_weights:
            return w.astype(mxu_dtype)
        return w

    weights = [maybe_cast(k, params[k]) for k in weight_order]

    def weight_spec(arr):
        nd = arr.ndim
        # Block index is constant across the grid -> single-buffer the weight
        # (double-buffering would only double its VMEM footprint).
        return pl.BlockSpec(arr.shape, lambda b, q, _nd=nd: (0,) * _nd,
                            pipeline_mode=pl.Buffered(1))

    in_specs = [pl.BlockSpec((1, block_q, C), lambda b, q: (b, q, 0))]
    in_specs += [weight_spec(w) for w in weights]

    kv_dtype = jnp.float32 if mxu_dtype is None else mxu_dtype
    # TODO(synk): a (H, D, T) K-cache layout would avoid the D<128 lane pad
    # entirely; for now the pad is budgeted in _vmem_limit_bytes.
    scratch_shapes = [
        pltpu.VMEM((n_head, T, D), kv_dtype),    # K cache (filled incrementally)
        pltpu.VMEM((n_head, T, D), kv_dtype),    # V cache
    ]

    w_item = 2 if mxu_dtype is not None else 4
    cost = pl.CostEstimate(
        flops=int(2 * B * T * C * (3 * C + C + 8 * C) + 2 * B * T * T * C),
        transcendentals=int(B * n_head * T * T // 2 + B * T * 4 * C),
        bytes_accessed=int(12 * C * C * w_item + 2 * B * T * C * x.dtype.itemsize),
    )

    return pl.pallas_call(
        functools.partial(block_kernel, n_head, mxu_dtype),
        out_shape=jax.ShapeDtypeStruct((B, T, C), x.dtype),
        grid=(B, num_q),
        in_specs=in_specs,
        out_specs=pl.BlockSpec((1, block_q, C), lambda b, q: (b, q, 0)),
        scratch_shapes=scratch_shapes,
        compiler_params=pltpu.CompilerParams(
            # B is megacore-parallel; the q axis must stay sequential because
            # the k/v caches are filled incrementally in causal order.
            dimension_semantics=("parallel", "arbitrary"),
            vmem_limit_bytes=_vmem_limit_bytes(T, C, n_head, block_q, mxu_dtype,
                                               vmem_cap),
        ),
        cost_estimate=cost,
    )(x, *weights)


def init_params(key, n_embd):
    C = n_embd
    k0, k1, k2, k3 = jax.random.split(key, 4)
    std = 0.02
    f32 = jnp.float32
    return {
        "ln1_g": jnp.ones((1, C), f32),
        "ln1_b": jnp.zeros((1, C), f32),
        "w_attn": std * jax.random.normal(k0, (C, 3 * C), f32),
        "b_attn": jnp.zeros((1, 3 * C), f32),
        "w_aproj": std * jax.random.normal(k1, (C, C), f32),
        "b_aproj": jnp.zeros((1, C), f32),
        "ln2_g": jnp.ones((1, C), f32),
        "ln2_b": jnp.zeros((1, C), f32),
        "w_fc": std * jax.random.normal(k2, (C, 4 * C), f32),
        "b_fc": jnp.zeros((1, 4 * C), f32),
        "w_mproj": std * jax.random.normal(k3, (4 * C, C), f32),
        "b_mproj": jnp.zeros((1, C), f32),
    }


def _reference_block(x, params, n_head):
    # Pure-JAX mirror of the PyTorch Block forward, for a correctness check.
    B, T, C = x.shape
    D = C // n_head
    h = _layernorm(x, params["ln1_g"], params["ln1_b"])
    qkv = h @ params["w_attn"] + params["b_attn"]
    q, k, v = jnp.split(qkv, 3, axis=-1)
    q = q.reshape(B, T, n_head, D).transpose(0, 2, 1, 3)
    k = k.reshape(B, T, n_head, D).transpose(0, 2, 1, 3)
    v = v.reshape(B, T, n_head, D).transpose(0, 2, 1, 3)
    s = (q @ k.transpose(0, 1, 3, 2)) / math.sqrt(D)
    mask = jnp.tril(jnp.ones((T, T), bool))
    s = jnp.where(mask, s, -1e30)
    p = jax.nn.softmax(s, axis=-1)
    a = (p @ v).transpose(0, 2, 1, 3).reshape(B, T, C)
    x = x + a @ params["w_aproj"] + params["b_aproj"]
    h2 = _layernorm(x, params["ln2_g"], params["ln2_b"])
    f = _gelu(h2 @ params["w_fc"] + params["b_fc"])
    return x + f @ params["w_mproj"] + params["b_mproj"]


if __name__ == "__main__":
    B, T, C, n_head = 2, 8, 32, 4   # batch, sequence, n_embd, heads

    key = jax.random.PRNGKey(0)
    k_params, k_x = jax.random.split(key)
    params = init_params(k_params, C)
    x = jax.random.normal(k_x, (B, T, C), jnp.float32)

    ref = _reference_block(x, params, n_head)

    out = gpt2_block(x, params, n_head)                 # default: bf16 MXU operands
    jax.block_until_ready(out)
    assert out.shape == (B, T, C) and out.dtype == jnp.float32
    err_bf16 = float(jnp.max(jnp.abs(out - ref)))
    assert err_bf16 < 5e-2, f"bf16-MXU path mismatch vs reference: {err_bf16}"

    out_f32 = gpt2_block(x, params, n_head, mxu_dtype=None)   # exact f32 path
    jax.block_until_ready(out_f32)
    err_f32 = float(jnp.max(jnp.abs(out_f32 - ref)))
    assert err_f32 < 1e-2, f"f32 path mismatch vs reference: {err_f32}"

    print("KERNEL_OK")
</pallas_src>

<mosaic_0001>
module attributes {stable_mosaic.version = 11 : i64} {
  func.func @block_kernel(%arg0: i32, %arg1: i32, %arg2: memref<1x8x32xf32, #tpu.memory_space<vmem>>, %arg3: memref<1x32xf32, #tpu.memory_space<vmem>>, %arg4: memref<1x32xf32, #tpu.memory_space<vmem>>, %arg5: memref<32x96xbf16, #tpu.memory_space<vmem>>, %arg6: memref<1x96xf32, #tpu.memory_space<vmem>>, %arg7: memref<32x32xbf16, #tpu.memory_space<vmem>>, %arg8: memref<1x32xf32, #tpu.memory_space<vmem>>, %arg9: memref<1x32xf32, #tpu.memory_space<vmem>>, %arg10: memref<1x32xf32, #tpu.memory_space<vmem>>, %arg11: memref<32x128xbf16, #tpu.memory_space<vmem>>, %arg12: memref<1x128xf32, #tpu.memory_space<vmem>>, %arg13: memref<128x32xbf16, #tpu.memory_space<vmem>>, %arg14: memref<1x32xf32, #tpu.memory_space<vmem>>, %arg15: memref<1x8x32xf32, #tpu.memory_space<vmem>>, %arg16: memref<4x8x8xbf16, #tpu.memory_space<vmem>>, %arg17: memref<4x8x8xbf16, #tpu.memory_space<vmem>>) attributes {dimension_semantics = [#tpu.dimension_semantics<parallel>, #tpu.dimension_semantics<arbitrary>], iteration_bounds = array<i64: 2, 1>, scalar_prefetch = 0 : i64, scratch_operands = 2 : i64, tpu.core_type = #tpu.core_type<tc>, window_params = [{transform_indices = @transform_0, window_bounds = array<i64: 1, 8, 32>}, {pipeline_mode = #tpu.pipeline_mode<synchronous>, transform_indices = @transform_1, window_bounds = array<i64: 1, 32>}, {pipeline_mode = #tpu.pipeline_mode<synchronous>, transform_indices = @transform_2, window_bounds = array<i64: 1, 32>}, {pipeline_mode = #tpu.pipeline_mode<synchronous>, transform_indices = @transform_3, window_bounds = array<i64: 32, 96>}, {pipeline_mode = #tpu.pipeline_mode<synchronous>, transform_indices = @transform_4, window_bounds = array<i64: 1, 96>}, {pipeline_mode = #tpu.pipeline_mode<synchronous>, transform_indices = @transform_5, window_bounds = array<i64: 32, 32>}, {pipeline_mode = #tpu.pipeline_mode<synchronous>, transform_indices = @transform_6, window_bounds = array<i64: 1, 32>}, {pipeline_mode = #tpu.pipeline_mode<synchronous>, transform_indices = @transform_7, window_bounds = array<i64: 1, 32>}, {pipeline_mode = #tpu.pipeline_mode<synchronous>, transform_indices = @transform_8, window_bounds = array<i64: 1, 32>}, {pipeline_mode = #tpu.pipeline_mode<synchronous>, transform_indices = @transform_9, window_bounds = array<i64: 32, 128>}, {pipeline_mode = #tpu.pipeline_mode<synchronous>, transform_indices = @transform_10, window_bounds = array<i64: 1, 128>}, {pipeline_mode = #tpu.pipeline_mode<synchronous>, transform_indices = @transform_11, window_bounds = array<i64: 128, 32>}, {pipeline_mode = #tpu.pipeline_mode<synchronous>, transform_indices = @transform_12, window_bounds = array<i64: 1, 32>}, {transform_indices = @transform_13, window_bounds = array<i64: 1, 8, 32>}]} {
    %c8_i32 = arith.constant 8 : i32
    %0 = arith.muli %arg1, %c8_i32 : i32
    %1 = tpu.assume_multiple %0, 8 : i32
    %c0 = arith.constant 0 : index
    %c0_0 = arith.constant 0 : index
    %c0_1 = arith.constant 0 : index
    %2 = vector.load %arg2[%c0, %c0_0, %c0_1] : memref<1x8x32xf32, #tpu.memory_space<vmem>>, vector<1x8x32xf32>
    %3 = vector.shape_cast %2 : vector<1x8x32xf32> to vector<8x32xf32>
    %c0_2 = arith.constant 0 : index
    %c0_3 = arith.constant 0 : index
    %4 = vector.load %arg3[%c0_2, %c0_3] : memref<1x32xf32, #tpu.memory_space<vmem>>, vector<1x32xf32>
    %c0_4 = arith.constant 0 : index
    %c0_5 = arith.constant 0 : index
    %5 = vector.load %arg4[%c0_4, %c0_5] : memref<1x32xf32, #tpu.memory_space<vmem>>, vector<1x32xf32>
    %cst = arith.constant dense<0.000000e+00> : vector<8xf32>
    %6 = vector.multi_reduction <add>, %3, %cst [1] : vector<8x32xf32> to vector<8xf32>
    %7 = vector.shape_cast %6 : vector<8xf32> to vector<8x1xf32>
    %cst_6 = arith.constant 3.200000e+01 : f32
    %8 = vector.broadcast %cst_6 : f32 to vector<8x1xf32>
    %9 = arith.divf %7, %8 : vector<8x1xf32>
    %10 = vector.broadcast %9 : vector<8x1xf32> to vector<8x32xf32>
    %11 = arith.subf %3, %10 : vector<8x32xf32>
    %12 = arith.mulf %11, %11 : vector<8x32xf32>
    %cst_7 = arith.constant dense<0.000000e+00> : vector<8xf32>
    %13 = vector.multi_reduction <add>, %12, %cst_7 [1] : vector<8x32xf32> to vector<8xf32>
    %14 = vector.shape_cast %13 : vector<8xf32> to vector<8x1xf32>
    %cst_8 = arith.constant 3.200000e+01 : f32
    %15 = vector.broadcast %cst_8 : f32 to vector<8x1xf32>
    %16 = arith.divf %14, %15 : vector<8x1xf32>
    %17 = vector.broadcast %9 : vector<8x1xf32> to vector<8x32xf32>
    %18 = arith.subf %3, %17 : vector<8x32xf32>
    %cst_9 = arith.constant 9.99999974E-6 : f32
    %19 = vector.broadcast %cst_9 : f32 to vector<8x1xf32>
    %20 = arith.addf %16, %19 : vector<8x1xf32>
    %21 = math.rsqrt %20 : vector<8x1xf32>
    %22 = vector.broadcast %21 : vector<8x1xf32> to vector<8x32xf32>
    %23 = arith.mulf %18, %22 : vector<8x32xf32>
    %24 = vector.broadcast %4 : vector<1x32xf32> to vector<8x32xf32>
    %25 = arith.mulf %23, %24 : vector<8x32xf32>
    %26 = vector.broadcast %5 : vector<1x32xf32> to vector<8x32xf32>
    %27 = arith.addf %25, %26 : vector<8x32xf32>
    %c0_10 = arith.constant 0 : index
    %c0_11 = arith.constant 0 : index
    %28 = vector.load %arg5[%c0_10, %c0_11] : memref<32x96xbf16, #tpu.memory_space<vmem>>, vector<32x96xbf16>
    %29 = arith.truncf %27 : vector<8x32xf32> to vector<8x32xbf16>
    %cst_12 = arith.constant dense<0.000000e+00> : vector<8x96xf32>
    %30 = tpu.matmul %29, %28, %cst_12 {dimension_numbers = #tpu.dot_dimension_numbers<[1], [0], [0], [1], [0, 0, 1, 1], [], []>} : vector<8x32xbf16>, vector<32x96xbf16>, vector<8x96xf32> -> vector<8x96xf32>
    %c0_13 = arith.constant 0 : index
    %c0_14 = arith.constant 0 : index
    %31 = vector.load %arg6[%c0_13, %c0_14] : memref<1x96xf32, #tpu.memory_space<vmem>>, vector<1x96xf32>
    %32 = vector.broadcast %31 : vector<1x96xf32> to vector<8x96xf32>
    %33 = arith.addf %30, %32 : vector<8x96xf32>
    %34 = vector.extract_strided_slice %33 {offsets = [0, 32], sizes = [8, 8], strides = [1, 1]} : vector<8x96xf32> to vector<8x8xf32>
    %35 = arith.truncf %34 : vector<8x8xf32> to vector<8x8xbf16>
    %c0_15 = arith.constant 0 : index
    %36 = arith.index_cast %1 : i32 to index
    %c0_16 = arith.constant 0 : index
    %37 = vector.load %arg16[%c0_15, %36, %c0_16] : memref<4x8x8xbf16, #tpu.memory_space<vmem>>, vector<1x8x8xbf16>
    %38 = vector.shape_cast %37 : vector<1x8x8xbf16> to vector<8x8xbf16>
    %39 = vector.shape_cast %35 : vector<8x8xbf16> to vector<1x8x8xbf16>
    tpu.vector_store %arg16[%c0_15, %36, %c0_16], %39 {strides = array<i32>} : memref<4x8x8xbf16, #tpu.memory_space<vmem>>, vector<1x8x8xbf16>,
    %40 = vector.extract_strided_slice %33 {offsets = [0, 64], sizes = [8, 8], strides = [1, 1]} : vector<8x96xf32> to vector<8x8xf32>
    %41 = arith.truncf %40 : vector<8x8xf32> to vector<8x8xbf16>
    %c0_17 = arith.constant 0 : index
    %42 = arith.index_cast %1 : i32 to index
    %c0_18 = arith.constant 0 : index
    %43 = vector.load %arg17[%c0_17, %42, %c0_18] : memref<4x8x8xbf16, #tpu.memory_space<vmem>>, vector<1x8x8xbf16>
    %44 = vector.shape_cast %43 : vector<1x8x8xbf16> to vector<8x8xbf16>
    %45 = vector.shape_cast %41 : vector<8x8xbf16> to vector<1x8x8xbf16>
    tpu.vector_store %arg17[%c0_17, %42, %c0_18], %45 {strides = array<i32>} : memref<4x8x8xbf16, #tpu.memory_space<vmem>>, vector<1x8x8xbf16>,
    %46 = vector.extract_strided_slice %33 {offsets = [0, 40], sizes = [8, 8], strides = [1, 1]} : vector<8x96xf32> to vector<8x8xf32>
    %47 = arith.truncf %46 : vector<8x8xf32> to vector<8x8xbf16>
    %c1 = arith.constant 1 : index
    %48 = arith.index_cast %1 : i32 to index
    %c0_19 = arith.constant 0 : index
    %49 = vector.load %arg16[%c1, %48, %c0_19] : memref<4x8x8xbf16, #tpu.memory_space<vmem>>, vector<1x8x8xbf16>
    %50 = vector.shape_cast %49 : vector<1x8x8xbf16> to vector<8x8xbf16>
    %51 = vector.shape_cast %47 : vector<8x8xbf16> to vector<1x8x8xbf16>
    tpu.vector_store %arg16[%c1, %48, %c0_19], %51 {strides = array<i32>} : memref<4x8x8xbf16, #tpu.memory_space<vmem>>, vector<1x8x8xbf16>,
    %52 = vector.extract_strided_slice %33 {offsets = [0, 72], sizes = [8, 8], strides = [1, 1]} : vector<8x96xf32> to vector<8x8xf32>
    %53 = arith.truncf %52 : vector<8x8xf32> to vector<8x8xbf16>
    %c1_20 = arith.constant 1 : index
    %54 = arith.index_cast %1 : i32 to index
    %c0_21 = arith.constant 0 : index
    %55 = vector.load %arg17[%c1_20, %54, %c0_21] : memref<4x8x8xbf16, #tpu.memory_space<vmem>>, vector<1x8x8xbf16>
    %56 = vector.shape_cast %55 : vector<1x8x8xbf16> to vector<8x8xbf16>
    %57 = vector.shape_cast %53 : vector<8x8xbf16> to vector<1x8x8xbf16>
    tpu.vector_store %arg17[%c1_20, %54, %c0_21], %57 {strides = array<i32>} : memref<4x8x8xbf16, #tpu.memory_space<vmem>>, vector<1x8x8xbf16>,
    %58 = vector.extract_strided_slice %33 {offsets = [0, 48], sizes = [8, 8], strides = [1, 1]} : vector<8x96xf32> to vector<8x8xf32>
    %59 = arith.truncf %58 : vector<8x8xf32> to vector<8x8xbf16>
    %c2 = arith.constant 2 : index
    %60 = arith.index_cast %1 : i32 to index
    %c0_22 = arith.constant 0 : index
    %61 = vector.load %arg16[%c2, %60, %c0_22] : memref<4x8x8xbf16, #tpu.memory_space<vmem>>, vector<1x8x8xbf16>
    %62 = vector.shape_cast %61 : vector<1x8x8xbf16> to vector<8x8xbf16>
    %63 = vector.shape_cast %59 : vector<8x8xbf16> to vector<1x8x8xbf16>
    tpu.vector_store %arg16[%c2, %60, %c0_22], %63 {strides = array<i32>} : memref<4x8x8xbf16, #tpu.memory_space<vmem>>, vector<1x8x8xbf16>,
    %64 = vector.extract_strided_slice %33 {offsets = [0, 80], sizes = [8, 8], strides = [1, 1]} : vector<8x96xf32> to vector<8x8xf32>
    %65 = arith.truncf %64 : vector<8x8xf32> to vector<8x8xbf16>
    %c2_23 = arith.constant 2 : index
    %66 = arith.index_cast %1 : i32 to index
    %c0_24 = arith.constant 0 : index
    %67 = vector.load %arg17[%c2_23, %66, %c0_24] : memref<4x8x8xbf16, #tpu.memory_space<vmem>>, vector<1x8x8xbf16>
    %68 = vector.shape_cast %67 : vector<1x8x8xbf16> to vector<8x8xbf16>
    %69 = vector.shape_cast %65 : vector<8x8xbf16> to vector<1x8x8xbf16>
    tpu.vector_store %arg17[%c2_23, %66, %c0_24], %69 {strides = array<i32>} : memref<4x8x8xbf16, #tpu.memory_space<vmem>>, vector<1x8x8xbf16>,
    %70 = vector.extract_strided_slice %33 {offsets = [0, 56], sizes = [8, 8], strides = [1, 1]} : vector<8x96xf32> to vector<8x8xf32>
    %71 = arith.truncf %70 : vector<8x8xf32> to vector<8x8xbf16>
    %c3 = arith.constant 3 : index
    %72 = arith.index_cast %1 : i32 to index
    %c0_25 = arith.constant 0 : index
    %73 = vector.load %arg16[%c3, %72, %c0_25] : memref<4x8x8xbf16, #tpu.memory_space<vmem>>, vector<1x8x8xbf16>
    %74 = vector.shape_cast %73 : vector<1x8x8xbf16> to vector<8x8xbf16>
    %75 = vector.shape_cast %71 : vector<8x8xbf16> to vector<1x8x8xbf16>
    tpu.vector_store %arg16[%c3, %72, %c0_25], %75 {strides = array<i32>} : memref<4x8x8xbf16, #tpu.memory_space<vmem>>, vector<1x8x8xbf16>,
    %76 = vector.extract_strided_slice %33 {offsets = [0, 88], sizes = [8, 8], strides = [1, 1]} : vector<8x96xf32> to vector<8x8xf32>
    %77 = arith.truncf %76 : vector<8x8xf32> to vector<8x8xbf16>
    %c3_26 = arith.constant 3 : index
    %78 = arith.index_cast %1 : i32 to index
    %c0_27 = arith.constant 0 : index
    %79 = vector.load %arg17[%c3_26, %78, %c0_27] : memref<4x8x8xbf16, #tpu.memory_space<vmem>>, vector<1x8x8xbf16>
    %80 = vector.shape_cast %79 : vector<1x8x8xbf16> to vector<8x8xbf16>
    %81 = vector.shape_cast %77 : vector<8x8xbf16> to vector<1x8x8xbf16>
    tpu.vector_store %arg17[%c3_26, %78, %c0_27], %81 {strides = array<i32>} : memref<4x8x8xbf16, #tpu.memory_space<vmem>>, vector<1x8x8xbf16>,
    %82 = vector.extract_strided_slice %33 {offsets = [0, 0], sizes = [8, 8], strides = [1, 1]} : vector<8x96xf32> to vector<8x8xf32>
    %83 = vector.extract_strided_slice %33 {offsets = [0, 8], sizes = [8, 8], strides = [1, 1]} : vector<8x96xf32> to vector<8x8xf32>
    %84 = vector.extract_strided_slice %33 {offsets = [0, 16], sizes = [8, 8], strides = [1, 1]} : vector<8x96xf32> to vector<8x8xf32>
    %85 = vector.extract_strided_slice %33 {offsets = [0, 24], sizes = [8, 8], strides = [1, 1]} : vector<8x96xf32> to vector<8x8xf32>
    %86 = vector.shape_cast %82 : vector<8x8xf32> to vector<1x8x8xf32>
    %87 = vector.shape_cast %83 : vector<8x8xf32> to vector<1x8x8xf32>
    %88 = vector.shape_cast %84 : vector<8x8xf32> to vector<1x8x8xf32>
    %89 = vector.shape_cast %85 : vector<8x8xf32> to vector<1x8x8xf32>
    %90 = tpu.concatenate %86, %87, %88, %89 in 0 : vector<1x8x8xf32>, vector<1x8x8xf32>, vector<1x8x8xf32>, vector<1x8x8xf32> -> vector<4x8x8xf32>
    %cst_28 = arith.constant 0.353553385 : f32
    %91 = vector.broadcast %cst_28 : f32 to vector<4x8x8xf32>
    %92 = arith.mulf %90, %91 : vector<4x8x8xf32>
    %93 = arith.truncf %92 : vector<4x8x8xf32> to vector<4x8x8xbf16>
    %cst_29 = arith.constant -1.000000e+30 : f32
    %94 = vector.broadcast %cst_29 : f32 to vector<4x8x1xf32>
    %cst_30 = arith.constant 0.000000e+00 : f32
    %95 = vector.broadcast %cst_30 : f32 to vector<4x8x1xf32>
    %cst_31 = arith.constant 0.000000e+00 : f32
    %96 = vector.broadcast %cst_31 : f32 to vector<4x8x8xf32>
    %c0_i32 = arith.constant 0 : i32
    %97 = arith.subi %arg1, %c0_i32 : i32
    %98 = arith.addi %c0_i32, %97 : i32
    %c1_i32 = arith.constant 1 : i32
    %99:3 = scf.for %arg18 = %c0_i32 to %98 step %c1_i32 iter_args(%arg19 = %94, %arg20 = %95, %arg21 = %96) -> (vector<4x8x1xf32>, vector<4x8x1xf32>, vector<4x8x8xf32>)  : i32 {
      %c8_i32_72 = arith.constant 8 : i32
      %202 = arith.muli %arg18, %c8_i32_72 : i32
      %203 = tpu.assume_multiple %202, 8 : i32
      %c0_73 = arith.constant 0 : index
      %204 = arith.index_cast %203 : i32 to index
      %c0_74 = arith.constant 0 : index
      %205 = vector.load %arg16[%c0_73, %204, %c0_74] : memref<4x8x8xbf16, #tpu.memory_space<vmem>>, vector<4x8x8xbf16>
      %c0_75 = arith.constant 0 : index
      %206 = arith.index_cast %203 : i32 to index
      %c0_76 = arith.constant 0 : index
      %207 = vector.load %arg17[%c0_75, %206, %c0_76] : memref<4x8x8xbf16, #tpu.memory_space<vmem>>, vector<4x8x8xbf16>
      "tpu.trace_start"() <{level = 10 : i32, message = "hqd,hkd->hqk"}> : () -> ()
      %cst_77 = arith.constant dense<0.000000e+00> : vector<4x8x8xf32>
      %208 = tpu.matmul %93, %205, %cst_77 {dimension_numbers = #tpu.dot_dimension_numbers<[2], [2], [1], [1], [0, 0, 0, 1, 1, 1], [0], [0]>} : vector<4x8x8xbf16>, vector<4x8x8xbf16>, vector<4x8x8xf32> -> vector<4x8x8xf32>
      "tpu.trace_stop"() : () -> ()
      %cst_78 = arith.constant dense<0xFF800000> : vector<4x8xf32>
      %209 = vector.multi_reduction <maximumf>, %208, %cst_78 [2] : vector<4x8x8xf32> to vector<4x8xf32>
      %210 = vector.shape_cast %209 : vector<4x8xf32> to vector<4x8x1xf32>
      %211 = arith.maximumf %arg19, %210 : vector<4x8x1xf32>
      %212 = arith.subf %arg19, %211 : vector<4x8x1xf32>
      %213 = math.exp %212 : vector<4x8x1xf32>
      %214 = vector.broadcast %211 : vector<4x8x1xf32> to vector<4x8x8xf32>
      %215 = arith.subf %208, %214 : vector<4x8x8xf32>
      %216 = math.exp %215 : vector<4x8x8xf32>
      %217 = arith.mulf %213, %arg20 : vector<4x8x1xf32>
      %cst_79 = arith.constant dense<0.000000e+00> : vector<4x8xf32>
      %218 = vector.multi_reduction <add>, %216, %cst_79 [2] : vector<4x8x8xf32> to vector<4x8xf32>
      %219 = vector.shape_cast %218 : vector<4x8xf32> to vector<4x8x1xf32>
      %220 = arith.addf %217, %219 : vector<4x8x1xf32>
      %221 = arith.truncf %216 : vector<4x8x8xf32> to vector<4x8x8xbf16>
      "tpu.trace_start"() <{level = 10 : i32, message = "hqk,hkd->hqd"}> : () -> ()
      %cst_80 = arith.constant dense<0.000000e+00> : vector<4x8x8xf32>
      %222 = tpu.matmul %221, %207, %cst_80 {dimension_numbers = #tpu.dot_dimension_numbers<[2], [1], [1], [2], [0, 0, 0, 1, 1, 2], [0], [0]>} : vector<4x8x8xbf16>, vector<4x8x8xbf16>, vector<4x8x8xf32> -> vector<4x8x8xf32>
      "tpu.trace_stop"() : () -> ()
      %223 = vector.broadcast %213 : vector<4x8x1xf32> to vector<4x8x8xf32>
      %224 = arith.mulf %223, %arg21 : vector<4x8x8xf32>
      %225 = arith.addf %224, %222 : vector<4x8x8xf32>
      scf.yield %211, %220, %225 : vector<4x8x1xf32>, vector<4x8x1xf32>, vector<4x8x8xf32>
    }
    %100 = tpu.iota {dimensions = array<i32: 0>} : vector<8x8xi32>
    %101 = tpu.iota {dimensions = array<i32: 1>} : vector<8x8xi32>
    %102 = arith.cmpi sge, %100, %101 : vector<8x8xi32>
    %103 = vector.shape_cast %102 : vector<8x8xi1> to vector<1x8x8xi1>
    %c0_32 = arith.constant 0 : index
    %104 = arith.index_cast %1 : i32 to index
    %c0_33 = arith.constant 0 : index
    %105 = vector.load %arg16[%c0_32, %104, %c0_33] : memref<4x8x8xbf16, #tpu.memory_space<vmem>>, vector<4x8x8xbf16>
    %c0_34 = arith.constant 0 : index
    %106 = arith.index_cast %1 : i32 to index
    %c0_35 = arith.constant 0 : index
    %107 = vector.load %arg17[%c0_34, %106, %c0_35] : memref<4x8x8xbf16, #tpu.memory_space<vmem>>, vector<4x8x8xbf16>
    "tpu.trace_start"() <{level = 10 : i32, message = "hqd,hkd->hqk"}> : () -> ()
    %cst_36 = arith.constant dense<0.000000e+00> : vector<4x8x8xf32>
    %108 = tpu.matmul %93, %105, %cst_36 {dimension_numbers = #tpu.dot_dimension_numbers<[2], [2], [1], [1], [0, 0, 0, 1, 1, 1], [0], [0]>} : vector<4x8x8xbf16>, vector<4x8x8xbf16>, vector<4x8x8xf32> -> vector<4x8x8xf32>
    %cst_37 = arith.constant -1.000000e+30 : f32
    "tpu.trace_stop"() : () -> ()
    %109 = vector.shape_cast %103 : vector<1x8x8xi1> to vector<1x8x8xi1>
    %110 = vector.broadcast %109 : vector<1x8x8xi1> to vector<4x8x8xi1>
    %111 = vector.broadcast %cst_37 : f32 to vector<4x8x8xf32>
    %112 = arith.select %110, %108, %111 : vector<4x8x8xi1>, vector<4x8x8xf32>
    %cst_38 = arith.constant dense<0xFF800000> : vector<4x8xf32>
    %113 = vector.multi_reduction <maximumf>, %112, %cst_38 [2] : vector<4x8x8xf32> to vector<4x8xf32>
    %114 = vector.shape_cast %113 : vector<4x8xf32> to vector<4x8x1xf32>
    %115 = arith.maximumf %99#0, %114 : vector<4x8x1xf32>
    %116 = arith.subf %99#0, %115 : vector<4x8x1xf32>
    %117 = math.exp %116 : vector<4x8x1xf32>
    %118 = vector.broadcast %115 : vector<4x8x1xf32> to vector<4x8x8xf32>
    %119 = arith.subf %112, %118 : vector<4x8x8xf32>
    %120 = math.exp %119 : vector<4x8x8xf32>
    %121 = arith.mulf %117, %99#1 : vector<4x8x1xf32>
    %cst_39 = arith.constant dense<0.000000e+00> : vector<4x8xf32>
    %122 = vector.multi_reduction <add>, %120, %cst_39 [2] : vector<4x8x8xf32> to vector<4x8xf32>
    %123 = vector.shape_cast %122 : vector<4x8xf32> to vector<4x8x1xf32>
    %124 = arith.addf %121, %123 : vector<4x8x1xf32>
    %125 = arith.truncf %120 : vector<4x8x8xf32> to vector<4x8x8xbf16>
    "tpu.trace_start"() <{level = 10 : i32, message = "hqk,hkd->hqd"}> : () -> ()
    %cst_40 = arith.constant dense<0.000000e+00> : vector<4x8x8xf32>
    %126 = tpu.matmul %125, %107, %cst_40 {dimension_numbers = #tpu.dot_dimension_numbers<[2], [1], [1], [2], [0, 0, 0, 1, 1, 2], [0], [0]>} : vector<4x8x8xbf16>, vector<4x8x8xbf16>, vector<4x8x8xf32> -> vector<4x8x8xf32>
    "tpu.trace_stop"() : () -> ()
    %127 = vector.broadcast %117 : vector<4x8x1xf32> to vector<4x8x8xf32>
    %128 = arith.mulf %127, %99#2 : vector<4x8x8xf32>
    %129 = arith.addf %128, %126 : vector<4x8x8xf32>
    %130 = tpu.reciprocal %124 {approx = true} : vector<4x8x1xf32> -> vector<4x8x1xf32>
    %131 = vector.broadcast %130 : vector<4x8x1xf32> to vector<4x8x8xf32>
    %132 = arith.mulf %129, %131 : vector<4x8x8xf32>
    %133 = vector.extract_strided_slice %132 {offsets = [0, 0, 0], sizes = [1, 8, 8], strides = [1, 1, 1]} : vector<4x8x8xf32> to vector<1x8x8xf32>
    %134 = vector.shape_cast %133 : vector<1x8x8xf32> to vector<8x8xf32>
    %135 = vector.extract_strided_slice %132 {offsets = [1, 0, 0], sizes = [1, 8, 8], strides = [1, 1, 1]} : vector<4x8x8xf32> to vector<1x8x8xf32>
    %136 = vector.shape_cast %135 : vector<1x8x8xf32> to vector<8x8xf32>
    %137 = vector.extract_strided_slice %132 {offsets = [2, 0, 0], sizes = [1, 8, 8], strides = [1, 1, 1]} : vector<4x8x8xf32> to vector<1x8x8xf32>
    %138 = vector.shape_cast %137 : vector<1x8x8xf32> to vector<8x8xf32>
    %139 = vector.extract_strided_slice %132 {offsets = [3, 0, 0], sizes = [1, 8, 8], strides = [1, 1, 1]} : vector<4x8x8xf32> to vector<1x8x8xf32>
    %140 = vector.shape_cast %139 : vector<1x8x8xf32> to vector<8x8xf32>
    %141 = tpu.concatenate %134, %136, %138, %140 in 1 : vector<8x8xf32>, vector<8x8xf32>, vector<8x8xf32>, vector<8x8xf32> -> vector<8x32xf32>
    %c0_41 = arith.constant 0 : index
    %c0_42 = arith.constant 0 : index
    %142 = vector.load %arg7[%c0_41, %c0_42] : memref<32x32xbf16, #tpu.memory_space<vmem>>, vector<32x32xbf16>
    %143 = arith.truncf %141 : vector<8x32xf32> to vector<8x32xbf16>
    %cst_43 = arith.constant dense<0.000000e+00> : vector<8x32xf32>
    %144 = tpu.matmul %143, %142, %cst_43 {dimension_numbers = #tpu.dot_dimension_numbers<[1], [0], [0], [1], [0, 0, 1, 1], [], []>} : vector<8x32xbf16>, vector<32x32xbf16>, vector<8x32xf32> -> vector<8x32xf32>
    %145 = arith.addf %3, %144 : vector<8x32xf32>
    %c0_44 = arith.constant 0 : index
    %c0_45 = arith.constant 0 : index
    %146 = vector.load %arg8[%c0_44, %c0_45] : memref<1x32xf32, #tpu.memory_space<vmem>>, vector<1x32xf32>
    %147 = vector.broadcast %146 : vector<1x32xf32> to vector<8x32xf32>
    %148 = arith.addf %145, %147 : vector<8x32xf32>
    %c0_46 = arith.constant 0 : index
    %c0_47 = arith.constant 0 : index
    %149 = vector.load %arg9[%c0_46, %c0_47] : memref<1x32xf32, #tpu.memory_space<vmem>>, vector<1x32xf32>
    %c0_48 = arith.constant 0 : index
    %c0_49 = arith.constant 0 : index
    %150 = vector.load %arg10[%c0_48, %c0_49] : memref<1x32xf32, #tpu.memory_space<vmem>>, vector<1x32xf32>
    %cst_50 = arith.constant dense<0.000000e+00> : vector<8xf32>
    %151 = vector.multi_reduction <add>, %148, %cst_50 [1] : vector<8x32xf32> to vector<8xf32>
    %152 = vector.shape_cast %151 : vector<8xf32> to vector<8x1xf32>
    %cst_51 = arith.constant 3.200000e+01 : f32
    %153 = vector.broadcast %cst_51 : f32 to vector<8x1xf32>
    %154 = arith.divf %152, %153 : vector<8x1xf32>
    %155 = vector.broadcast %154 : vector<8x1xf32> to vector<8x32xf32>
    %156 = arith.subf %148, %155 : vector<8x32xf32>
    %157 = arith.mulf %156, %156 : vector<8x32xf32>
    %cst_52 = arith.constant dense<0.000000e+00> : vector<8xf32>
    %158 = vector.multi_reduction <add>, %157, %cst_52 [1] : vector<8x32xf32> to vector<8xf32>
    %159 = vector.shape_cast %158 : vector<8xf32> to vector<8x1xf32>
    %cst_53 = arith.constant 3.200000e+01 : f32
    %160 = vector.broadcast %cst_53 : f32 to vector<8x1xf32>
    %161 = arith.divf %159, %160 : vector<8x1xf32>
    %162 = vector.broadcast %154 : vector<8x1xf32> to vector<8x32xf32>
    %163 = arith.subf %148, %162 : vector<8x32xf32>
    %cst_54 = arith.constant 9.99999974E-6 : f32
    %164 = vector.broadcast %cst_54 : f32 to vector<8x1xf32>
    %165 = arith.addf %161, %164 : vector<8x1xf32>
    %166 = math.rsqrt %165 : vector<8x1xf32>
    %167 = vector.broadcast %166 : vector<8x1xf32> to vector<8x32xf32>
    %168 = arith.mulf %163, %167 : vector<8x32xf32>
    %169 = vector.broadcast %149 : vector<1x32xf32> to vector<8x32xf32>
    %170 = arith.mulf %168, %169 : vector<8x32xf32>
    %171 = vector.broadcast %150 : vector<1x32xf32> to vector<8x32xf32>
    %172 = arith.addf %170, %171 : vector<8x32xf32>
    %c0_55 = arith.constant 0 : index
    %c0_56 = arith.constant 0 : index
    %173 = vector.load %arg11[%c0_55, %c0_56] : memref<32x128xbf16, #tpu.memory_space<vmem>>, vector<32x128xbf16>
    %174 = arith.truncf %172 : vector<8x32xf32> to vector<8x32xbf16>
    %cst_57 = arith.constant dense<0.000000e+00> : vector<8x128xf32>
    %175 = tpu.matmul %174, %173, %cst_57 {dimension_numbers = #tpu.dot_dimension_numbers<[1], [0], [0], [1], [0, 0, 1, 1], [], []>} : vector<8x32xbf16>, vector<32x128xbf16>, vector<8x128xf32> -> vector<8x128xf32>
    %c0_58 = arith.constant 0 : index
    %c0_59 = arith.constant 0 : index
    %176 = vector.load %arg12[%c0_58, %c0_59] : memref<1x128xf32, #tpu.memory_space<vmem>>, vector<1x128xf32>
    %177 = vector.broadcast %176 : vector<1x128xf32> to vector<8x128xf32>
    %178 = arith.addf %175, %177 : vector<8x128xf32>
    %cst_60 = arith.constant 5.000000e-01 : f32
    %179 = vector.broadcast %cst_60 : f32 to vector<8x128xf32>
    %180 = arith.mulf %179, %178 : vector<8x128xf32>
    %cst_61 = arith.constant 4.471500e-02 : f32
    %181 = vector.broadcast %cst_61 : f32 to vector<8x128xf32>
    %182 = arith.mulf %181, %178 : vector<8x128xf32>
    %183 = arith.mulf %182, %178 : vector<8x128xf32>
    %184 = arith.mulf %183, %178 : vector<8x128xf32>
    %185 = arith.addf %178, %184 : vector<8x128xf32>
    %cst_62 = arith.constant 0.797884583 : f32
    %186 = vector.broadcast %cst_62 : f32 to vector<8x128xf32>
    %187 = arith.mulf %186, %185 : vector<8x128xf32>
    %188 = math.tanh %187 : vector<8x128xf32>
    %cst_63 = arith.constant 1.000000e+00 : f32
    %189 = vector.broadcast %cst_63 : f32 to vector<8x128xf32>
    %190 = arith.addf %189, %188 : vector<8x128xf32>
    %191 = arith.mulf %180, %190 : vector<8x128xf32>
    %c0_64 = arith.constant 0 : index
    %c0_65 = arith.constant 0 : index
    %192 = vector.load %arg13[%c0_64, %c0_65] : memref<128x32xbf16, #tpu.memory_space<vmem>>, vector<128x32xbf16>
    %193 = arith.truncf %191 : vector<8x128xf32> to vector<8x128xbf16>
    %cst_66 = arith.constant dense<0.000000e+00> : vector<8x32xf32>
    %194 = tpu.matmul %193, %192, %cst_66 {dimension_numbers = #tpu.dot_dimension_numbers<[1], [0], [0], [1], [0, 0, 1, 1], [], []>} : vector<8x128xbf16>, vector<128x32xbf16>, vector<8x32xf32> -> vector<8x32xf32>
    %195 = arith.addf %148, %194 : vector<8x32xf32>
    %c0_67 = arith.constant 0 : index
    %c0_68 = arith.constant 0 : index
    %196 = vector.load %arg14[%c0_67, %c0_68] : memref<1x32xf32, #tpu.memory_space<vmem>>, vector<1x32xf32>
    %197 = vector.broadcast %196 : vector<1x32xf32> to vector<8x32xf32>
    %198 = arith.addf %195, %197 : vector<8x32xf32>
    %c0_69 = arith.constant 0 : index
    %c0_70 = arith.constant 0 : index
    %c0_71 = arith.constant 0 : index
    %199 = vector.load %arg15[%c0_69, %c0_70, %c0_71] : memref<1x8x32xf32, #tpu.memory_space<vmem>>, vector<1x8x32xf32>
    %200 = vector.shape_cast %199 : vector<1x8x32xf32> to vector<8x32xf32>
    %201 = vector.shape_cast %198 : vector<8x32xf32> to vector<1x8x32xf32>
    tpu.vector_store %arg15[%c0_69, %c0_70, %c0_71], %201 {strides = array<i32>} : memref<1x8x32xf32, #tpu.memory_space<vmem>>, vector<1x8x32xf32>,
    return
  }
  func.func @transform_0(%arg0: i32, %arg1: i32) -> (i32, i32, i32) {
    %c0_i32 = arith.constant 0 : i32
    %c0_i32_0 = arith.constant 0 : i32
    return %arg0, %arg1, %c0_i32 : i32, i32, i32
  }
  func.func @transform_1(%arg0: i32, %arg1: i32) -> (i32, i32) {
    %c0_i32 = arith.constant 0 : i32
    %c0_i32_0 = arith.constant 0 : i32
    %c0_i32_1 = arith.constant 0 : i32
    return %c0_i32, %c0_i32_0 : i32, i32
  }
  func.func @transform_2(%arg0: i32, %arg1: i32) -> (i32, i32) {
    %c0_i32 = arith.constant 0 : i32
    %c0_i32_0 = arith.constant 0 : i32
    %c0_i32_1 = arith.constant 0 : i32
    return %c0_i32, %c0_i32_0 : i32, i32
  }
  func.func @transform_3(%arg0: i32, %arg1: i32) -> (i32, i32) {
    %c0_i32 = arith.constant 0 : i32
    %c0_i32_0 = arith.constant 0 : i32
    %c0_i32_1 = arith.constant 0 : i32
    return %c0_i32, %c0_i32_0 : i32, i32
  }
  func.func @transform_4(%arg0: i32, %arg1: i32) -> (i32, i32) {
    %c0_i32 = arith.constant 0 : i32
    %c0_i32_0 = arith.constant 0 : i32
    %c0_i32_1 = arith.constant 0 : i32
    return %c0_i32, %c0_i32_0 : i32, i32
  }
  func.func @transform_5(%arg0: i32, %arg1: i32) -> (i32, i32) {
    %c0_i32 = arith.constant 0 : i32
    %c0_i32_0 = arith.constant 0 : i32
    %c0_i32_1 = arith.constant 0 : i32
    return %c0_i32, %c0_i32_0 : i32, i32
  }
  func.func @transform_6(%arg0: i32, %arg1: i32) -> (i32, i32) {
    %c0_i32 = arith.constant 0 : i32
    %c0_i32_0 = arith.constant 0 : i32
    %c0_i32_1 = arith.constant 0 : i32
    return %c0_i32, %c0_i32_0 : i32, i32
  }
  func.func @transform_7(%arg0: i32, %arg1: i32) -> (i32, i32) {
    %c0_i32 = arith.constant 0 : i32
    %c0_i32_0 = arith.constant 0 : i32
    %c0_i32_1 = arith.constant 0 : i32
    return %c0_i32, %c0_i32_0 : i32, i32
  }
  func.func @transform_8(%arg0: i32, %arg1: i32) -> (i32, i32) {
    %c0_i32 = arith.constant 0 : i32
    %c0_i32_0 = arith.constant 0 : i32
    %c0_i32_1 = arith.constant 0 : i32
    return %c0_i32, %c0_i32_0 : i32, i32
  }
  func.func @transform_9(%arg0: i32, %arg1: i32) -> (i32, i32) {
    %c0_i32 = arith.constant 0 : i32
    %c0_i32_0 = arith.constant 0 : i32
    %c0_i32_1 = arith.constant 0 : i32
    return %c0_i32, %c0_i32_0 : i32, i32
  }
  func.func @transform_10(%arg0: i32, %arg1: i32) -> (i32, i32) {
    %c0_i32 = arith.constant 0 : i32
    %c0_i32_0 = arith.constant 0 : i32
    %c0_i32_1 = arith.constant 0 : i32
    return %c0_i32, %c0_i32_0 : i32, i32
  }
  func.func @transform_11(%arg0: i32, %arg1: i32) -> (i32, i32) {
    %c0_i32 = arith.constant 0 : i32
    %c0_i32_0 = arith.constant 0 : i32
    %c0_i32_1 = arith.constant 0 : i32
    return %c0_i32, %c0_i32_0 : i32, i32
  }
  func.func @transform_12(%arg0: i32, %arg1: i32) -> (i32, i32) {
    %c0_i32 = arith.constant 0 : i32
    %c0_i32_0 = arith.constant 0 : i32
    %c0_i32_1 = arith.constant 0 : i32
    return %c0_i32, %c0_i32_0 : i32, i32
  }
  func.func @transform_13(%arg0: i32, %arg1: i32) -> (i32, i32, i32) {
    %c0_i32 = arith.constant 0 : i32
    %c0_i32_0 = arith.constant 0 : i32
    return %arg0, %arg1, %c0_i32 : i32, i32, i32
  }
}

</mosaic_0001>

<llo_original>
// kernel: tpu_custom_call.1
$region0: #{tpu_custom_call.1}
  #allocation0 [shape = 'u32[]', space=smem, size = 0x4, offset = 0x4, fixed_abs, tag = 'smem constant byte address 0x4 - core index']
  #allocation1 [shape = 'u32[144,128]{1,0:T(1,128)}', space=vmem, size = 0x12000, scoped, tag = 'internal scratch']
  #allocation2 [shape = 'bf16[4,8,8]{2,1,0:T(8,128)(2,1)}', space=vmem, size = 0x2000, scoped, tag = 'scratch operand']
  #allocation3 [shape = 'bf16[4,8,8]{2,1,0:T(8,128)(2,1)}', space=vmem, size = 0x2000, scoped, tag = 'scratch operand']
  %s0 = inlined_call_operand.vmem [shape: f32[2,8,32], index: 0, kind: input, shape index: {}]
  %s1 = inlined_call_operand.vmem [shape: f32[1,32], index: 1, kind: input, shape index: {}]
  %s2 = inlined_call_operand.vmem [shape: f32[1,32], index: 2, kind: input, shape index: {}]
  %s3 = inlined_call_operand.vmem [shape: bf16[32,96], index: 3, kind: input, shape index: {}]
  %s4 = inlined_call_operand.vmem [shape: f32[1,96], index: 4, kind: input, shape index: {}]
  %s5 = inlined_call_operand.vmem [shape: bf16[32,32], index: 5, kind: input, shape index: {}]
  %s6 = inlined_call_operand.vmem [shape: f32[1,32], index: 6, kind: input, shape index: {}]
  %s7 = inlined_call_operand.vmem [shape: f32[1,32], index: 7, kind: input, shape index: {}]
  %s8 = inlined_call_operand.vmem [shape: f32[1,32], index: 8, kind: input, shape index: {}]
  %s9 = inlined_call_operand.vmem [shape: bf16[32,128], index: 9, kind: input, shape index: {}]
  %s10 = inlined_call_operand.vmem [shape: f32[1,128], index: 10, kind: input, shape index: {}]
  %s11 = inlined_call_operand.vmem [shape: bf16[128,32], index: 11, kind: input, shape index: {}]
  %s12 = inlined_call_operand.vmem [shape: f32[1,32], index: 12, kind: input, shape index: {}]
  %s13 = inlined_call_operand.hbm [shape: f32[2,8,32], index: 13, kind: output, shape index: {}]
  %s14 = sld [smem:[#allocation0]]
  $region92: #{tpu_custom_call.1} parent=0
    _
  %s16 = ssub.s32 1, %s14
  %s17 = scalar_select 0, %s16, %s14
  $region1: #{tpu_custom_call.1} parent=0
    #allocation4 [shape = 'u8[8192]{0}', space=vmem, size = 0x2000, scoped, tag = 'output window, operand 0']
    #allocation5 [shape = 's32[2]{0}', space=sflag, size = 0x8, scoped, tag = 'scoped memory for tpu_custom_call.1']
    %18 = vsyncpa [#allocation5], 0
    %s19 = scalar_lea.sflag [#allocation5], 1
    %20 = vsyncpa %s19, 0
    loop: start=0, step=1, limit=4
    $region2: #{tpu_custom_call.1} parent=1 // loop_pre_header
      _
    $region3: #{tpu_custom_call.1} parent=1 // loop_header
      %s22 = sphi 0, %s26
      %p23 = scmp.ge.s32.totalorder %s22, 4
      %s29 = sphi 0, %s41
      %s30 = sphi 0, %s37
      %s31 = sphi 0, %s29
      %s32 = sphi 0, %s30
      %s33 = sphi 0, %s31
      %s34 = sphi 0, %s32
      %s46 = sphi 0, %s48
      %s49 = sphi 0, %s46
      %s50 = sphi 0, %s49
      %s66 = sphi 0, %s50
      %s70 = sphi 0, %s70
      %s72 = sphi 0, %s70
      %s73 = sphi 0, %s72
      %s87 = sphi 0, %s73
      %s91 = sphi 0, %s91
      %s93 = sphi 0, %s91
      %s94 = sphi 0, %s93
      %s108 = sphi 0, %s94
      %s112 = sphi 0, %s112
      %s114 = sphi 0, %s112
      %s115 = sphi 0, %s114
      %s129 = sphi 0, %s115
      %s133 = sphi 0, %s133
      %s135 = sphi 0, %s133
      %s136 = sphi 0, %s135
      %s150 = sphi 0, %s136
      %s154 = sphi 0, %s154
      %s156 = sphi 0, %s154
      %s157 = sphi 0, %s156
      %s171 = sphi 0, %s157
      %s175 = sphi 0, %s175
      %s177 = sphi 0, %s175
      %s178 = sphi 0, %s177
      %s192 = sphi 0, %s178
      %s196 = sphi 0, %s196
      %s198 = sphi 0, %s196
      %s199 = sphi 0, %s198
      %s213 = sphi 0, %s199
      %s217 = sphi 0, %s217
      %s219 = sphi 0, %s217
      %s220 = sphi 0, %s219
      %s234 = sphi 0, %s220
      %s238 = sphi 0, %s238
      %s240 = sphi 0, %s238
      %s241 = sphi 0, %s240
      %s255 = sphi 0, %s241
      %s259 = sphi 0, %s259
      %s261 = sphi 0, %s259
      %s262 = sphi 0, %s261
      %s276 = sphi 0, %s262
      %s280 = sphi 0, %s280
      %s282 = sphi 0, %s280
      %s283 = sphi 0, %s282
      %s297 = sphi 0, %s283
      %s301 = sphi 0, %s301
      %s303 = sphi 0, %s301
      %s304 = sphi 0, %s303
      %s318 = sphi 0, %s304
      %s326 = sphi 0, %s328
      %s329 = sphi 0, %s326
      %s330 = sphi 0, %s329
      %s346 = sphi 0, %s330
    $region4: #{tpu_custom_call.1} parent=1 // loop_header_branch
      %25 = sbr.rel (%p23) target = $region8
    $region5: #{tpu_custom_call.1} parent=1 // loop_body
      %s27 = ssub.s32 %s22, 1
      %s28 = ssub.s32 %s22, 2
      %s35 = sadd.s32 1, %s30
      %p36 = scmp.ge.s32.totalorder %s35, 1
      %s37 = scalar_select %p36, 0, %s35
      %s38 = sadd.s32 1, %s29
      %s39 = scalar_select %p36, %s38, %s29
      %p40 = scmp.ge.s32.totalorder %s39, 2
      %s41 = scalar_select %p40, 0, %s39
      %s42 = ssub.s32 %s29, %s41
      %s43 = ssub.s32 %s30, %s37
      %s44 = sor.u32 %s42, %s43
      %p45 = scmp.eq.s32.totalorder %s44, 0
      %s47 = sadd.s32 %s46, 1
      %s48 = scalar_select %p45, %s46, %s47
      %p51 = pneg %p45
      %p52 = scmp.eq.s32.totalorder %s22, 1
      %p53 = por %p51, %p52
      %p54 = scmp.ne.s32.totalorder %s46, %s49
      %p55 = scmp.eq.s32.totalorder %s22, 0
      %p56 = por %p54, %p55
      %p57 = scmp.ne.s32.totalorder %s46, %s49
      %p58 = scmp.eq.s32.totalorder %s27, 1
      %p59 = por %p57, %p58
      %p60 = scmp.ne.s32.totalorder %s49, %s50
      %p61 = scmp.eq.s32.totalorder %s27, 0
      %p62 = por %p60, %p61
      %p63 = scmp.ne.s32.totalorder %s49, %s50
      %p64 = scmp.eq.s32.totalorder %s28, 1
      %p65 = por %p63, %p64
      %p67 = scmp.ne.s32.totalorder %s50, %s66
      %p68 = scmp.eq.s32.totalorder %s28, 0
      %p69 = por %p67, %p68
      %s71 = sadd.s32 %s70, 1
      %p74 = scmp.eq.s32.totalorder %s22, 1
      %p75 = scmp.ne.s32.totalorder %s70, %s72
      %p76 = scmp.eq.s32.totalorder %s22, 0
      %p77 = por %p75, %p76
      %p78 = scmp.ne.s32.totalorder %s70, %s72
      %p79 = scmp.eq.s32.totalorder %s27, 1
      %p80 = por %p78, %p79
      %p81 = scmp.ne.s32.totalorder %s72, %s73
      %p82 = scmp.eq.s32.totalorder %s27, 0
      %p83 = por %p81, %p82
      %p84 = scmp.ne.s32.totalorder %s72, %s73
      %p85 = scmp.eq.s32.totalorder %s28, 1
      %p86 = por %p84, %p85
      %p88 = scmp.ne.s32.totalorder %s73, %s87
      %p89 = scmp.eq.s32.totalorder %s28, 0
      %p90 = por %p88, %p89
      %s92 = sadd.s32 %s91, 1
      %p95 = scmp.eq.s32.totalorder %s22, 1
      %p96 = scmp.ne.s32.totalorder %s91, %s93
      %p97 = scmp.eq.s32.totalorder %s22, 0
      %p98 = por %p96, %p97
      %p99 = scmp.ne.s32.totalorder %s91, %s93
      %p100 = scmp.eq.s32.totalorder %s27, 1
      %p101 = por %p99, %p100
      %p102 = scmp.ne.s32.totalorder %s93, %s94
      %p103 = scmp.eq.s32.totalorder %s27, 0
      %p104 = por %p102, %p103
      %p105 = scmp.ne.s32.totalorder %s93, %s94
      %p106 = scmp.eq.s32.totalorder %s28, 1
      %p107 = por %p105, %p106
      %p109 = scmp.ne.s32.totalorder %s94, %s108
      %p110 = scmp.eq.s32.totalorder %s28, 0
      %p111 = por %p109, %p110
      %s113 = sadd.s32 %s112, 1
      %p116 = scmp.eq.s32.totalorder %s22, 1
      %p117 = scmp.ne.s32.totalorder %s112, %s114
      %p118 = scmp.eq.s32.totalorder %s22, 0
      %p119 = por %p117, %p118
      %p120 = scmp.ne.s32.totalorder %s112, %s114
      %p121 = scmp.eq.s32.totalorder %s27, 1
      %p122 = por %p120, %p121
      %p123 = scmp.ne.s32.totalorder %s114, %s115
      %p124 = scmp.eq.s32.totalorder %s27, 0
      %p125 = por %p123, %p124
      %p126 = scmp.ne.s32.totalorder %s114, %s115
      %p127 = scmp.eq.s32.totalorder %s28, 1
      %p128 = por %p126, %p127
      %p130 = scmp.ne.s32.totalorder %s115, %s129
      %p131 = scmp.eq.s32.totalorder %s28, 0
      %p132 = por %p130, %p131
      %s134 = sadd.s32 %s133, 1
      %p137 = scmp.eq.s32.totalorder %s22, 1
      %p138 = scmp.ne.s32.totalorder %s133, %s135
      %p139 = scmp.eq.s32.totalorder %s22, 0
      %p140 = por %p138, %p139
      %p141 = scmp.ne.s32.totalorder %s133, %s135
      %p142 = scmp.eq.s32.totalorder %s27, 1
      %p143 = por %p141, %p142
      %p144 = scmp.ne.s32.totalorder %s135, %s136
      %p145 = scmp.eq.s32.totalorder %s27, 0
      %p146 = por %p144, %p145
      %p147 = scmp.ne.s32.totalorder %s135, %s136
      %p148 = scmp.eq.s32.totalorder %s28, 1
      %p149 = por %p147, %p148
      %p151 = scmp.ne.s32.totalorder %s136, %s150
      %p152 = scmp.eq.s32.totalorder %s28, 0
      %p153 = por %p151, %p152
      %s155 = sadd.s32 %s154, 1
      %p158 = scmp.eq.s32.totalorder %s22, 1
      %p159 = scmp.ne.s32.totalorder %s154, %s156
      %p160 = scmp.eq.s32.totalorder %s22, 0
      %p161 = por %p159, %p160
      %p162 = scmp.ne.s32.totalorder %s154, %s156
      %p163 = scmp.eq.s32.totalorder %s27, 1
      %p164 = por %p162, %p163
      %p165 = scmp.ne.s32.totalorder %s156, %s157
      %p166 = scmp.eq.s32.totalorder %s27, 0
      %p167 = por %p165, %p166
      %p168 = scmp.ne.s32.totalorder %s156, %s157
      %p169 = scmp.eq.s32.totalorder %s28, 1
      %p170 = por %p168, %p169
      %p172 = scmp.ne.s32.totalorder %s157, %s171
      %p173 = scmp.eq.s32.totalorder %s28, 0
      %p174 = por %p172, %p173
      %s176 = sadd.s32 %s175, 1
      %p179 = scmp.eq.s32.totalorder %s22, 1
      %p180 = scmp.ne.s32.totalorder %s175, %s177
      %p181 = scmp.eq.s32.totalorder %s22, 0
      %p182 = por %p180, %p181
      %p183 = scmp.ne.s32.totalorder %s175, %s177
      %p184 = scmp.eq.s32.totalorder %s27, 1
      %p185 = por %p183, %p184
      %p186 = scmp.ne.s32.totalorder %s177, %s178
      %p187 = scmp.eq.s32.totalorder %s27, 0
      %p188 = por %p186, %p187
      %p189 = scmp.ne.s32.totalorder %s177, %s178
      %p190 = scmp.eq.s32.totalorder %s28, 1
      %p191 = por %p189, %p190
      %p193 = scmp.ne.s32.totalorder %s178, %s192
      %p194 = scmp.eq.s32.totalorder %s28, 0
      %p195 = por %p193, %p194
      %s197 = sadd.s32 %s196, 1
      %p200 = scmp.eq.s32.totalorder %s22, 1
      %p201 = scmp.ne.s32.totalorder %s196, %s198
      %p202 = scmp.eq.s32.totalorder %s22, 0
      %p203 = por %p201, %p202
      %p204 = scmp.ne.s32.totalorder %s196, %s198
      %p205 = scmp.eq.s32.totalorder %s27, 1
      %p206 = por %p204, %p205
      %p207 = scmp.ne.s32.totalorder %s198, %s199
      %p208 = scmp.eq.s32.totalorder %s27, 0
      %p209 = por %p207, %p208
      %p210 = scmp.ne.s32.totalorder %s198, %s199
      %p211 = scmp.eq.s32.totalorder %s28, 1
      %p212 = por %p210, %p211
      %p214 = scmp.ne.s32.totalorder %s199, %s213
      %p215 = scmp.eq.s32.totalorder %s28, 0
      %p216 = por %p214, %p215
      %s218 = sadd.s32 %s217, 1
      %p221 = scmp.eq.s32.totalorder %s22, 1
      %p222 = scmp.ne.s32.totalorder %s217, %s219
      %p223 = scmp.eq.s32.totalorder %s22, 0
      %p224 = por %p222, %p223
      %p225 = scmp.ne.s32.totalorder %s217, %s219
      %p226 = scmp.eq.s32.totalorder %s27, 1
      %p227 = por %p225, %p226
      %p228 = scmp.ne.s32.totalorder %s219, %s220
      %p229 = scmp.eq.s32.totalorder %s27, 0
      %p230 = por %p228, %p229
      %p231 = scmp.ne.s32.totalorder %s219, %s220
      %p232 = scmp.eq.s32.totalorder %s28, 1
      %p233 = por %p231, %p232
      %p235 = scmp.ne.s32.totalorder %s220, %s234
      %p236 = scmp.eq.s32.totalorder %s28, 0
      %p237 = por %p235, %p236
      %s239 = sadd.s32 %s238, 1
      %p242 = scmp.eq.s32.totalorder %s22, 1
      %p243 = scmp.ne.s32.totalorder %s238, %s240
      %p244 = scmp.eq.s32.totalorder %s22, 0
      %p245 = por %p243, %p244
      %p246 = scmp.ne.s32.totalorder %s238, %s240
      %p247 = scmp.eq.s32.totalorder %s27, 1
      %p248 = por %p246, %p247
      %p249 = scmp.ne.s32.totalorder %s240, %s241
      %p250 = scmp.eq.s32.totalorder %s27, 0
      %p251 = por %p249, %p250
      %p252 = scmp.ne.s32.totalorder %s240, %s241
      %p253 = scmp.eq.s32.totalorder %s28, 1
      %p254 = por %p252, %p253
      %p256 = scmp.ne.s32.totalorder %s241, %s255
      %p257 = scmp.eq.s32.totalorder %s28, 0
      %p258 = por %p256, %p257
      %s260 = sadd.s32 %s259, 1
      %p263 = scmp.eq.s32.totalorder %s22, 1
      %p264 = scmp.ne.s32.totalorder %s259, %s261
      %p265 = scmp.eq.s32.totalorder %s22, 0
      %p266 = por %p264, %p265
      %p267 = scmp.ne.s32.totalorder %s259, %s261
      %p268 = scmp.eq.s32.totalorder %s27, 1
      %p269 = por %p267, %p268
      %p270 = scmp.ne.s32.totalorder %s261, %s262
      %p271 = scmp.eq.s32.totalorder %s27, 0
      %p272 = por %p270, %p271
      %p273 = scmp.ne.s32.totalorder %s261, %s262
      %p274 = scmp.eq.s32.totalorder %s28, 1
      %p275 = por %p273, %p274
      %p277 = scmp.ne.s32.totalorder %s262, %s276
      %p278 = scmp.eq.s32.totalorder %s28, 0
      %p279 = por %p277, %p278
      %s281 = sadd.s32 %s280, 1
      %p284 = scmp.eq.s32.totalorder %s22, 1
      %p285 = scmp.ne.s32.totalorder %s280, %s282
      %p286 = scmp.eq.s32.totalorder %s22, 0
      %p287 = por %p285, %p286
      %p288 = scmp.ne.s32.totalorder %s280, %s282
      %p289 = scmp.eq.s32.totalorder %s27, 1
      %p290 = por %p288, %p289
      %p291 = scmp.ne.s32.totalorder %s282, %s283
      %p292 = scmp.eq.s32.totalorder %s27, 0
      %p293 = por %p291, %p292
      %p294 = scmp.ne.s32.totalorder %s282, %s283
      %p295 = scmp.eq.s32.totalorder %s28, 1
      %p296 = por %p294, %p295
      %p298 = scmp.ne.s32.totalorder %s283, %s297
      %p299 = scmp.eq.s32.totalorder %s28, 0
      %p300 = por %p298, %p299
      %s302 = sadd.s32 %s301, 1
      %p305 = scmp.eq.s32.totalorder %s22, 1
      %p306 = scmp.ne.s32.totalorder %s301, %s303
      %p307 = scmp.eq.s32.totalorder %s22, 0
      %p308 = por %p306, %p307
      %p309 = scmp.ne.s32.totalorder %s301, %s303
      %p310 = scmp.eq.s32.totalorder %s27, 1
      %p311 = por %p309, %p310
      %p312 = scmp.ne.s32.totalorder %s303, %s304
      %p313 = scmp.eq.s32.totalorder %s27, 0
      %p314 = por %p312, %p313
      %p315 = scmp.ne.s32.totalorder %s303, %s304
      %p316 = scmp.eq.s32.totalorder %s28, 1
      %p317 = por %p315, %p316
      %p319 = scmp.ne.s32.totalorder %s304, %s318
      %p320 = scmp.eq.s32.totalorder %s28, 0
      %p321 = por %p319, %p320
      %s322 = ssub.s32 %s29, %s41
      %s323 = ssub.s32 %s30, %s37
      %s324 = sor.u32 %s322, %s323
      %p325 = scmp.eq.s32.totalorder %s324, 0
      %s327 = sadd.s32 %s326, 1
      %s328 = scalar_select %p325, %s326, %s327
      %p331 = pneg %p325
      %p332 = scmp.eq.s32.totalorder %s22, 1
      %p333 = por %p331, %p332
      %p334 = scmp.ne.s32.totalorder %s326, %s329
      %p335 = scmp.eq.s32.totalorder %s22, 0
      %p336 = por %p334, %p335
      %p337 = scmp.ne.s32.totalorder %s326, %s329
      %p338 = scmp.eq.s32.totalorder %s27, 1
      %p339 = por %p337, %p338
      %p340 = scmp.ne.s32.totalorder %s329, %s330
      %p341 = scmp.eq.s32.totalorder %s27, 0
      %p342 = por %p340, %p341
      %p343 = scmp.ne.s32.totalorder %s329, %s330
      %p344 = scmp.eq.s32.totalorder %s28, 1
      %p345 = por %p343, %p344
      %p347 = scmp.ne.s32.totalorder %s330, %s346
      %p348 = scmp.eq.s32.totalorder %s28, 0
      %p349 = por %p347, %p348
      %p350 = scmp.le.s32.totalorder 1, %s22
      %p351 = scmp.lt.s32.totalorder %s22, 3
      %p352 = pnand %p350, %p351
      %p353 = pneg %p352
      // Predicated region
      $region9: #{tpu_custom_call.1} parent=5 // pred_check
        _
      $region10: #{tpu_custom_call.1} parent=5 // pred_check_branch
        %355 = sbr.rel (%p352) target = $region12
      $region11: #{tpu_custom_call.1} parent=5 // pred_region
        %s356 = ssub.s32 %s22, 1
        // Predicated region
        $region13: #{tpu_custom_call.1} parent=11 // pred_check
          %p357 = pneg %p83
        $region14: #{tpu_custom_call.1} parent=11 // pred_check_branch
          %359 = sbr.rel (%p357) target = $region16
        $region15: #{tpu_custom_call.1} parent=11 // pred_region
          _
        $region16: #{tpu_custom_call.1} parent=11 // pred_fallthru
          _
        // Predicated region
        $region17: #{tpu_custom_call.1} parent=11 // pred_check
          %p360 = pneg %p104
        $region18: #{tpu_custom_call.1} parent=11 // pred_check_branch
          %362 = sbr.rel (%p360) target = $region20
        $region19: #{tpu_custom_call.1} parent=11 // pred_region
          _
        $region20: #{tpu_custom_call.1} parent=11 // pred_fallthru
          _
        // Predicated region
        $region21: #{tpu_custom_call.1} parent=11 // pred_check
          %p363 = pneg %p125
        $region22: #{tpu_custom_call.1} parent=11 // pred_check_branch
          %365 = sbr.rel (%p363) target = $region24
        $region23: #{tpu_custom_call.1} parent=11 // pred_region
          _
        $region24: #{tpu_custom_call.1} parent=11 // pred_fallthru
          _
        // Predicated region
        $region25: #{tpu_custom_call.1} parent=11 // pred_check
          %p366 = pneg %p146
        $region26: #{tpu_custom_call.1} parent=11 // pred_check_branch
          %368 = sbr.rel (%p366) target = $region28
        $region27: #{tpu_custom_call.1} parent=11 // pred_region
          _
        $region28: #{tpu_custom_call.1} parent=11 // pred_fallthru
          _
        // Predicated region
        $region29: #{tpu_custom_call.1} parent=11 // pred_check
          %p369 = pneg %p167
        $region30: #{tpu_custom_call.1} parent=11 // pred_check_branch
          %371 = sbr.rel (%p369) target = $region32
        $region31: #{tpu_custom_call.1} parent=11 // pred_region
          _
        $region32: #{tpu_custom_call.1} parent=11 // pred_fallthru
          _
        // Predicated region
        $region33: #{tpu_custom_call.1} parent=11 // pred_check
          %p372 = pneg %p188
        $region34: #{tpu_custom_call.1} parent=11 // pred_check_branch
          %374 = sbr.rel (%p372) target = $region36
        $region35: #{tpu_custom_call.1} parent=11 // pred_region
          _
        $region36: #{tpu_custom_call.1} parent=11 // pred_fallthru
          _
        // Predicated region
        $region37: #{tpu_custom_call.1} parent=11 // pred_check
          %p375 = pneg %p209
        $region38: #{tpu_custom_call.1} parent=11 // pred_check_branch
          %377 = sbr.rel (%p375) target = $region40
        $region39: #{tpu_custom_call.1} parent=11 // pred_region
          _
        $region40: #{tpu_custom_call.1} parent=11 // pred_fallthru
          _
        // Predicated region
        $region41: #{tpu_custom_call.1} parent=11 // pred_check
          %p378 = pneg %p230
        $region42: #{tpu_custom_call.1} parent=11 // pred_check_branch
          %380 = sbr.rel (%p378) target = $region44
        $region43: #{tpu_custom_call.1} parent=11 // pred_region
          _
        $region44: #{tpu_custom_call.1} parent=11 // pred_fallthru
          _
        // Predicated region
        $region45: #{tpu_custom_call.1} parent=11 // pred_check
          %p381 = pneg %p251
        $region46: #{tpu_custom_call.1} parent=11 // pred_check_branch
          %383 = sbr.rel (%p381) target = $region48
        $region47: #{tpu_custom_call.1} parent=11 // pred_region
          _
        $region48: #{tpu_custom_call.1} parent=11 // pred_fallthru
          _
        // Predicated region
        $region49: #{tpu_custom_call.1} parent=11 // pred_check
          %p384 = pneg %p272
        $region50: #{tpu_custom_call.1} parent=11 // pred_check_branch
          %386 = sbr.rel (%p384) target = $region52
        $region51: #{tpu_custom_call.1} parent=11 // pred_region
          _
        $region52: #{tpu_custom_call.1} parent=11 // pred_fallthru
          _
        // Predicated region
        $region53: #{tpu_custom_call.1} parent=11 // pred_check
          %p387 = pneg %p293
        $region54: #{tpu_custom_call.1} parent=11 // pred_check_branch
          %389 = sbr.rel (%p387) target = $region56
        $region55: #{tpu_custom_call.1} parent=11 // pred_region
          _
        $region56: #{tpu_custom_call.1} parent=11 // pred_fallthru
          _
        // Predicated region
        $region57: #{tpu_custom_call.1} parent=11 // pred_check
          %p390 = pneg %p314
        $region58: #{tpu_custom_call.1} parent=11 // pred_check_branch
          %392 = sbr.rel (%p390) target = $region60
        $region59: #{tpu_custom_call.1} parent=11 // pred_region
          _
        $region60: #{tpu_custom_call.1} parent=11 // pred_fallthru
          _
      $region12: #{tpu_custom_call.1} parent=5 // pred_fallthru
        _
      %p393 = scmp.lt.s32.totalorder %s22, 2
      // Predicated region
      $region61: #{tpu_custom_call.1} parent=5 // pred_check
        %p394 = pneg %p393
      $region62: #{tpu_custom_call.1} parent=5 // pred_check_branch
        %396 = sbr.rel (%p394) target = $region64
      $region63: #{tpu_custom_call.1} parent=5 // pred_region
        // Predicated region
        $region65: #{tpu_custom_call.1} parent=63 // pred_check
          %p397 = pneg %p56
        $region66: #{tpu_custom_call.1} parent=63 // pred_check_branch
          %399 = sbr.rel (%p397) target = $region68
        $region67: #{tpu_custom_call.1} parent=63 // pred_region
          %p400 = scmp.lt.s32.totalorder %s29, 1
          %s401 = scalar_select %p400, %s29, 1
          %p402 = scmp.lt.s32.totalorder %s30, 0
          %s403 = scalar_select %p402, %s30, 0
          %s404 = sadd.s32 %s403, %s401
          %s405 = smul.addr %s404, 8
          %s406 = scalar_lea.vmem %s0, %s405
        $region68: #{tpu_custom_call.1} parent=63 // pred_fallthru
          _
      $region64: #{tpu_custom_call.1} parent=5 // pred_fallthru
        _
      %p407 = scmp.le.s32.totalorder 1, %s22
      %p408 = scmp.lt.s32.totalorder %s22, 3
      %p409 = pnand %p407, %p408
      %p410 = pneg %p409
      // Predicated region
      $region69: #{tpu_custom_call.1} parent=5 // pred_check
        _
      $region70: #{tpu_custom_call.1} parent=5 // pred_check_branch
        %412 = sbr.rel (%p409) target = $region72
      $region71: #{tpu_custom_call.1} parent=5 // pred_region
        %s413 = ssub.s32 %s22, 1
        %p414 = scmp.lt.s32.totalorder %s31, 1
        %s415 = scalar_select %p414, %s31, 1
        %p416 = scmp.lt.s32.totalorder %s32, 0
        %s417 = scalar_select %p416, %s32, 0
        %s418 = sadd.s32 %s417, %s415
        %s419 = smul.addr %s418, 8
        %s420 = scalar_lea.vmem %s0, %s419
        %p421 = pneg %p62
        %p422 = pneg %p59
        %p423 = pneg %p83
        %p424 = pneg %p80
        %p425 = pneg %p104
        %p426 = pneg %p101
        %p427 = pneg %p125
        %p428 = pneg %p122
        %p429 = pneg %p146
        %p430 = pneg %p143
        %p431 = pneg %p167
        %p432 = pneg %p164
        %p433 = pneg %p188
        %p434 = pneg %p185
        %p435 = pneg %p209
        %p436 = pneg %p206
        %p437 = pneg %p230
        %p438 = pneg %p227
        %p439 = pneg %p251
        %p440 = pneg %p248
        %p441 = pneg %p272
        %p442 = pneg %p269
        %p443 = pneg %p293
        %p444 = pneg %p290
        %p445 = pneg %p314
        %p446 = pneg %p311
        %p447 = pneg %p342
        %p448 = pneg %p339
        %s449 = sand.u32 %s329, 1
        %s450 = scalar_lea.sflag [#allocation5], %s449
        %s451 = sand.u32 %s329, 1
        %s452 = smul.addr %s451, 8
        %s453 = scalar_lea.vmem [#allocation4], %s452
        %p454 = scmp.lt.s32.totalorder %s31, 1
        %s455 = scalar_select %p454, %s31, 1
        %p456 = scmp.lt.s32.totalorder %s32, 0
        %s457 = scalar_select %p456, %s32, 0
        %s458 = sadd.s32 %s457, %s455
        %s459 = smul.addr %s458, 8
        %s460 = scalar_lea.vmem %s0, %s459
        %s462 = smul.u32 %s32, 8
        %v463 = vld [vmem:[%s460] sm:$0xff]
        %v464 = vld [vmem:[%s1] sm:$0x1]
        %v465 = vld [vmem:[%s2] sm:$0x1]
        %vm466 = vcmask 261120
        %v467 = vsel %vm466, %v463, 0.0
        %468 = vadd.xlane.f32.xlu0 %v467
        %v469 = vpop.xlane.xlu0 %468
        %v470 = vrcp.pop 32.0
        %v471 = vmul.f32 %v469, %v470
        %v472 = vsub.f32 %v463, %v471
        %v473 = vmul.f32 %v472, %v472
        %v474 = vsel %vm466, %v473, 0.0
        %475 = vadd.xlane.f32.xlu0 %v474
        %v476 = vpop.xlane.xlu0 %475
        %v477 = vmul.f32 %v476, %v470
        %v478 = vadd.f32 %v477, 1e-05
        %v479 = vrsqrt.pop %v478
        %v480 = vmul.f32 %v472, %v479
        %v482 = vlaneseq
        %v483 = vshrl.u32 %v482, 7
        %v484 = vsub.s32 0, %v483
        %v485 = vrot.slane %v464, %v484
        %v487 = vmul.f32 %v480, %v485
        %v489 = vlaneseq
        %v490 = vshrl.u32 %v489, 7
        %v491 = vsub.s32 0, %v490
        %v492 = vrot.slane %v465, %v491
        %v494 = vadd.f32 %v487, %v492
        %v495 = vld [vmem:[%s3] sm:$0xf]
        %v496 = vld [vmem:[%s3 + $0x4] sm:$0xf]
        %v497 = vld [vmem:[%s3 + $0x8] sm:$0xf]
        %v498 = vld [vmem:[%s3 + $0xc] sm:$0xf]
        %v499 = vpack.c.bf16 %v494, %v494
        %v500 = vld [vmem:[%s4] sm:$0x1]
        %v502 = vlaneseq
        %v503 = vshrl.u32 %v502, 7
        %v504 = vsub.s32 0, %v503
        %v505 = vrot.slane %v500, %v504
        %v511 = vunpack.c.l.b16 %v495
        %v512 = vunpack.c.l.b16 %v496
        %v513 = vunpack.c.l.b16 %v497
        %v514 = vunpack.c.l.b16 %v498
        %v515 = vpack.c.b16 %v512, %v511
        %v516 = vpack.c.b16 %v514, %v513
        %v520 = vsel %vm466, %v499, 0
        %522 = vmatprep.subr.bf16.mxu0 0
        %523 = vmatpush1.bf16.msra.mxu0 %v515
        %524 = vmatprep.subr.bf16.mxu0 0
        %525 = vmatpush1.bf16.msra.mxu0 %v516
        %526 = vmatprep.subr.bf16.mxu0 0
        %527 = vmatpush1.bf16.msra.mxu0 0
        %528 = vmatprep.subr.bf16.mxu0 0
        %529 = vmatpush1.bf16.msra.mxu0 0
        %530 = vmatprep.subr.bf16.mxu0 0
        %531 = vmatpush1.bf16.msra.mxu0 0
        %532 = vmatprep.subr.bf16.mxu0 0
        %533 = vmatpush1.bf16.msra.mxu0 0
        %534 = vmatprep.subr.bf16.mxu0 0
        %535 = vmatpush1.bf16.msra.mxu0 0
        %536 = vmatprep.subr.bf16.mxu0 0
        %537 = vmatpush1.bf16.msra.mxu0 0
        %538 = vmatprep.subr.bf16.mxu0 0
        %539 = vmatpush1.bf16.msra.mxu0 0
        %540 = vmatprep.subr.bf16.mxu0 0
        %541 = vmatpush1.bf16.msra.mxu0 0
        %542 = vmatprep.subr.bf16.mxu0 0
        %543 = vmatpush1.bf16.msra.mxu0 0
        %544 = vmatprep.subr.bf16.mxu0 0
        %545 = vmatpush1.bf16.msra.mxu0 0
        %546 = vmatprep.subr.bf16.mxu0 0
        %547 = vmatpush1.bf16.msra.mxu0 0
        %548 = vmatprep.subr.bf16.mxu0 0
        %549 = vmatpush1.bf16.msra.mxu0 0
        %550 = vmatprep.subr.bf16.mxu0 0
        %551 = vmatpush1.bf16.msra.mxu0 0
        %552 = vmatprep.subr.bf16.mxu0 0
        %553 = vmatpush1.bf16.msra.mxu0 0
        %554 = vmatprep.mubr.bf16.mxu0 0
        %555 = vmatmul.mubr.bf16.gmra.mrb[0].mxu0 %v520
        %v556 = vpop.f32.mrb[0].mxu0
        %v557 = vadd.f32 %v505, %v556
        %v558 = vpop.f32.mrb[0].mxu0
        %v559 = vpop.f32.mrb[0].mxu0
        %v560 = vpop.f32.mrb[0].mxu0
        %561 = vdwg.mxu0
        %v562 = vpack.c.bf16 %v557, %v557
        %v564 = vunpack.c.l.b16 %v562
        %v565 = vpack.c.b16 %v564, %v564
        %566 = vrot.lane.b32.xlu0 %v565, 96
        %v567 = vpop.permute.xlu0 %566
        %s569 = sshra.s32 %s462, 3
        %s570 = sand.u32 %s462, 7
        %s571 = smul.addr %s569, 4
        %s572 = scalar_lea.vmem [#allocation2], %s571
        %vm573 = vcmask 60416
        %574 = vst.msk [vmem:[%s572] sm:$0xf] %vm573, %v567
        %575 = vrot.lane.b32.xlu0 %v565, 64
        %v576 = vpop.permute.xlu0 %575
        %s578 = smul.addr %s569, 4
        %s579 = scalar_lea.vmem [#allocation3], %s578
        %580 = vst.msk [vmem:[%s579] sm:$0xf] %vm573, %v576
        %581 = vrot.lane.b32.xlu0 %v565, 88
        %v582 = vpop.permute.xlu0 %581
        %s584 = sadd.s32 %s569, 1
        %s585 = smul.addr %s584, 4
        %s586 = scalar_lea.vmem [#allocation2], %s585
        %587 = vst.msk [vmem:[%s586] sm:$0xf] %vm573, %v582
        %588 = vrot.lane.b32.xlu0 %v565, 56
        %v589 = vpop.permute.xlu0 %588
        %s591 = smul.addr %s584, 4
        %s592 = scalar_lea.vmem [#allocation3], %s591
        %593 = vst.msk [vmem:[%s592] sm:$0xf] %vm573, %v589
        %594 = vrot.lane.b32.xlu0 %v565, 80
        %v595 = vpop.permute.xlu0 %594
        %s597 = sadd.s32 %s569, 2
        %s598 = smul.addr %s597, 4
        %s599 = scalar_lea.vmem [#allocation2], %s598
        %600 = vst.msk [vmem:[%s599] sm:$0xf] %vm573, %v595
        %601 = vrot.lane.b32.xlu0 %v565, 48
        %v602 = vpop.permute.xlu0 %601
        %s604 = smul.addr %s597, 4
        %s605 = scalar_lea.vmem [#allocation3], %s604
        %606 = vst.msk [vmem:[%s605] sm:$0xf] %vm573, %v602
        %607 = vrot.lane.b32.xlu0 %v565, 72
        %v608 = vpop.permute.xlu0 %607
        %s610 = sadd.s32 %s569, 3
        %s611 = smul.addr %s610, 4
        %s612 = scalar_lea.vmem [#allocation2], %s611
        %613 = vst.msk [vmem:[%s612] sm:$0xf] %vm573, %v608
        %614 = vrot.lane.b32.xlu0 %v565, 40
        %v615 = vpop.permute.xlu0 %614
        %s617 = smul.addr %s610, 4
        %s618 = scalar_lea.vmem [#allocation3], %s617
        %619 = vst.msk [vmem:[%s618] sm:$0xf] %vm573, %v615
        %621 = vrot.lane.b32.xlu0 %v557, 120
        %v622 = vpop.permute.xlu0 %621
        %624 = vrot.lane.b32.xlu0 %v557, 112
        %v625 = vpop.permute.xlu0 %624
        %627 = vrot.lane.b32.xlu0 %v557, 104
        %v628 = vpop.permute.xlu0 %627
        %v630 = vmul.f32 %v557, 0.35355338
        %v631 = vmul.f32 %v622, 0.35355338
        %v632 = vmul.f32 %v625, 0.35355338
        %v633 = vmul.f32 %v628, 0.35355338
        %v634 = vpack.c.bf16 %v630, %v630
        %v635 = vpack.c.bf16 %v631, %v631
        %v636 = vpack.c.bf16 %v632, %v632
        %v637 = vpack.c.bf16 %v633, %v633
        // While loop
        $region73: #{tpu_custom_call.1} parent=71 // loop_pre_header
          _
        $region74: #{tpu_custom_call.1} parent=71 // loop_header
          %s639 = sphi 0, %s641
          %p640 = scmp.ge.s32.totalorder %s639, %s32
          %v644 = vphi -1e+30, %v868
          %v645 = vphi -1e+30, %v869
          %v646 = vphi -1e+30, %v870
          %v647 = vphi -1e+30, %v871
          %v648 = vphi 0.0, %v912
          %v649 = vphi 0.0, %v913
          %v650 = vphi 0.0, %v914
          %v651 = vphi 0.0, %v915
          %v652 = vphi 0.0, %v1109
          %v653 = vphi 0.0, %v1110
          %v654 = vphi 0.0, %v1111
          %v655 = vphi 0.0, %v1112
        $region75: #{tpu_custom_call.1} parent=71 // loop_header_branch
          %643 = sbr.rel (%p640) target = $region79
        $region76: #{tpu_custom_call.1} parent=71 // loop_body
          %s656 = smul.u32 %s639, 8
          %s657 = sshra.s32 %s656, 3
          %s658 = sand.u32 %s656, 7
          %s659 = smul.addr %s657, 4
          %s660 = scalar_lea.vmem [#allocation2], %s659
          %v661 = vld [vmem:[%s660] sm:$0xf]
          %v662 = vld [vmem:[%s660 + $0x4] sm:$0xf]
          %v663 = vld [vmem:[%s660 + $0x8] sm:$0xf]
          %v664 = vld [vmem:[%s660 + $0xc] sm:$0xf]
          %s665 = smul.addr %s657, 4
          %s666 = scalar_lea.vmem [#allocation3], %s665
          %v667 = vld [vmem:[%s666] sm:$0xf]
          %v668 = vld [vmem:[%s666 + $0x4] sm:$0xf]
          %v669 = vld [vmem:[%s666 + $0x8] sm:$0xf]
          %v670 = vld [vmem:[%s666 + $0xc] sm:$0xf]
          %vm671 = vcmask 64512
          %v673 = vsel %vm671, %v634, 0
          %v676 = vsel %vm671, %v661, 0
          %678 = vmatprep.subr.bf16.mxu0 0
          %679 = vmatpush1.bf16.xpose.msra.mxu0 %v676
          %680 = vmatprep.subr.bf16.mxu0 0
          %681 = vmatpush1.bf16.xpose.msra.mxu0 0
          %682 = vmatprep.subr.bf16.mxu0 0
          %683 = vmatpush1.bf16.xpose.msra.mxu0 0
          %684 = vmatprep.subr.bf16.mxu0 0
          %685 = vmatpush1.bf16.xpose.msra.mxu0 0
          %686 = vmatprep.subr.bf16.mxu0 0
          %687 = vmatpush1.bf16.xpose.msra.mxu0 0
          %688 = vmatprep.subr.bf16.mxu0 0
          %689 = vmatpush1.bf16.xpose.msra.mxu0 0
          %690 = vmatprep.subr.bf16.mxu0 0
          %691 = vmatpush1.bf16.xpose.msra.mxu0 0
          %692 = vmatprep.subr.bf16.mxu0 0
          %693 = vmatpush1.bf16.xpose.msra.mxu0 0
          %694 = vmatprep.subr.bf16.mxu0 0
          %695 = vmatpush1.bf16.xpose.msra.mxu0 0
          %696 = vmatprep.subr.bf16.mxu0 0
          %697 = vmatpush1.bf16.xpose.msra.mxu0 0
          %698 = vmatprep.subr.bf16.mxu0 0
          %699 = vmatpush1.bf16.xpose.msra.mxu0 0
          %700 = vmatprep.subr.bf16.mxu0 0
          %701 = vmatpush1.bf16.xpose.msra.mxu0 0
          %702 = vmatprep.subr.bf16.mxu0 0
          %703 = vmatpush1.bf16.xpose.msra.mxu0 0
          %704 = vmatprep.subr.bf16.mxu0 0
          %705 = vmatpush1.bf16.xpose.msra.mxu0 0
          %706 = vmatprep.subr.bf16.mxu0 0
          %707 = vmatpush1.bf16.xpose.msra.mxu0 0
          %708 = vmatprep.subr.bf16.mxu0 0
          %709 = vmatpush1.bf16.xpose.msra.mxu0 0
          %710 = vmatprep.mubr.bf16.mxu0 0
          %711 = vmatmul.mubr.bf16.gmra.mrb[0].mxu0 %v673
          %v712 = vpop.f32.mrb[0].mxu0
          %v713 = vadd.f32 0.0, %v712
          %v714 = vpop.f32.mrb[0].mxu0
          %v715 = vpop.f32.mrb[0].mxu0
          %v716 = vpop.f32.mrb[0].mxu0
          %717 = vdwg.mxu0
          %v719 = vsel %vm671, %v635, 0
          %v722 = vsel %vm671, %v662, 0
          %724 = vmatprep.subr.bf16.mxu0 0
          %725 = vmatpush1.bf16.xpose.msra.mxu0 %v722
          %726 = vmatprep.subr.bf16.mxu0 0
          %727 = vmatpush1.bf16.xpose.msra.mxu0 0
          %728 = vmatprep.subr.bf16.mxu0 0
          %729 = vmatpush1.bf16.xpose.msra.mxu0 0
          %730 = vmatprep.subr.bf16.mxu0 0
          %731 = vmatpush1.bf16.xpose.msra.mxu0 0
          %732 = vmatprep.subr.bf16.mxu0 0
          %733 = vmatpush1.bf16.xpose.msra.mxu0 0
          %734 = vmatprep.subr.bf16.mxu0 0
          %735 = vmatpush1.bf16.xpose.msra.mxu0 0
          %736 = vmatprep.subr.bf16.mxu0 0
          %737 = vmatpush1.bf16.xpose.msra.mxu0 0
          %738 = vmatprep.subr.bf16.mxu0 0
          %739 = vmatpush1.bf16.xpose.msra.mxu0 0
          %740 = vmatprep.subr.bf16.mxu0 0
          %741 = vmatpush1.bf16.xpose.msra.mxu0 0
          %742 = vmatprep.subr.bf16.mxu0 0
          %743 = vmatpush1.bf16.xpose.msra.mxu0 0
          %744 = vmatprep.subr.bf16.mxu0 0
          %745 = vmatpush1.bf16.xpose.msra.mxu0 0
          %746 = vmatprep.subr.bf16.mxu0 0
          %747 = vmatpush1.bf16.xpose.msra.mxu0 0
          %748 = vmatprep.subr.bf16.mxu0 0
          %749 = vmatpush1.bf16.xpose.msra.mxu0 0
          %750 = vmatprep.subr.bf16.mxu0 0
          %751 = vmatpush1.bf16.xpose.msra.mxu0 0
          %752 = vmatprep.subr.bf16.mxu0 0
          %753 = vmatpush1.bf16.xpose.msra.mxu0 0
          %754 = vmatprep.subr.bf16.mxu0 0
          %755 = vmatpush1.bf16.xpose.msra.mxu0 0
          %756 = vmatprep.mubr.bf16.mxu0 0
          %757 = vmatmul.mubr.bf16.gmra.mrb[0].mxu0 %v719
          %v758 = vpop.f32.mrb[0].mxu0
          %v759 = vadd.f32 0.0, %v758
          %v760 = vpop.f32.mrb[0].mxu0
          %v761 = vpop.f32.mrb[0].mxu0
          %v762 = vpop.f32.mrb[0].mxu0
          %763 = vdwg.mxu0
          %v765 = vsel %vm671, %v636, 0
          %v768 = vsel %vm671, %v663, 0
          %770 = vmatprep.subr.bf16.mxu0 0
          %771 = vmatpush1.bf16.xpose.msra.mxu0 %v768
          %772 = vmatprep.subr.bf16.mxu0 0
          %773 = vmatpush1.bf16.xpose.msra.mxu0 0
          %774 = vmatprep.subr.bf16.mxu0 0
          %775 = vmatpush1.bf16.xpose.msra.mxu0 0
          %776 = vmatprep.subr.bf16.mxu0 0
          %777 = vmatpush1.bf16.xpose.msra.mxu0 0
          %778 = vmatprep.subr.bf16.mxu0 0
          %779 = vmatpush1.bf16.xpose.msra.mxu0 0
          %780 = vmatprep.subr.bf16.mxu0 0
          %781 = vmatpush1.bf16.xpose.msra.mxu0 0
          %782 = vmatprep.subr.bf16.mxu0 0
          %783 = vmatpush1.bf16.xpose.msra.mxu0 0
          %784 = vmatprep.subr.bf16.mxu0 0
          %785 = vmatpush1.bf16.xpose.msra.mxu0 0
          %786 = vmatprep.subr.bf16.mxu0 0
          %787 = vmatpush1.bf16.xpose.msra.mxu0 0
          %788 = vmatprep.subr.bf16.mxu0 0
          %789 = vmatpush1.bf16.xpose.msra.mxu0 0
          %790 = vmatprep.subr.bf16.mxu0 0
          %791 = vmatpush1.bf16.xpose.msra.mxu0 0
          %792 = vmatprep.subr.bf16.mxu0 0
          %793 = vmatpush1.bf16.xpose.msra.mxu0 0
          %794 = vmatprep.subr.bf16.mxu0 0
          %795 = vmatpush1.bf16.xpose.msra.mxu0 0
          %796 = vmatprep.subr.bf16.mxu0 0
          %797 = vmatpush1.bf16.xpose.msra.mxu0 0
          %798 = vmatprep.subr.bf16.mxu0 0
          %799 = vmatpush1.bf16.xpose.msra.mxu0 0
          %800 = vmatprep.subr.bf16.mxu0 0
          %801 = vmatpush1.bf16.xpose.msra.mxu0 0
          %802 = vmatprep.mubr.bf16.mxu0 0
          %803 = vmatmul.mubr.bf16.gmra.mrb[0].mxu0 %v765
          %v804 = vpop.f32.mrb[0].mxu0
          %v805 = vadd.f32 0.0, %v804
          %v806 = vpop.f32.mrb[0].mxu0
          %v807 = vpop.f32.mrb[0].mxu0
          %v808 = vpop.f32.mrb[0].mxu0
          %809 = vdwg.mxu0
          %v811 = vsel %vm671, %v637, 0
          %v814 = vsel %vm671, %v664, 0
          %816 = vmatprep.subr.bf16.mxu0 0
          %817 = vmatpush1.bf16.xpose.msra.mxu0 %v814
          %818 = vmatprep.subr.bf16.mxu0 0
          %819 = vmatpush1.bf16.xpose.msra.mxu0 0
          %820 = vmatprep.subr.bf16.mxu0 0
          %821 = vmatpush1.bf16.xpose.msra.mxu0 0
          %822 = vmatprep.subr.bf16.mxu0 0
          %823 = vmatpush1.bf16.xpose.msra.mxu0 0
          %824 = vmatprep.subr.bf16.mxu0 0
          %825 = vmatpush1.bf16.xpose.msra.mxu0 0
          %826 = vmatprep.subr.bf16.mxu0 0
          %827 = vmatpush1.bf16.xpose.msra.mxu0 0
          %828 = vmatprep.subr.bf16.mxu0 0
          %829 = vmatpush1.bf16.xpose.msra.mxu0 0
          %830 = vmatprep.subr.bf16.mxu0 0
          %831 = vmatpush1.bf16.xpose.msra.mxu0 0
          %832 = vmatprep.subr.bf16.mxu0 0
          %833 = vmatpush1.bf16.xpose.msra.mxu0 0
          %834 = vmatprep.subr.bf16.mxu0 0
          %835 = vmatpush1.bf16.xpose.msra.mxu0 0
          %836 = vmatprep.subr.bf16.mxu0 0
          %837 = vmatpush1.bf16.xpose.msra.mxu0 0
          %838 = vmatprep.subr.bf16.mxu0 0
          %839 = vmatpush1.bf16.xpose.msra.mxu0 0
          %840 = vmatprep.subr.bf16.mxu0 0
          %841 = vmatpush1.bf16.xpose.msra.mxu0 0
          %842 = vmatprep.subr.bf16.mxu0 0
          %843 = vmatpush1.bf16.xpose.msra.mxu0 0
          %844 = vmatprep.subr.bf16.mxu0 0
          %845 = vmatpush1.bf16.xpose.msra.mxu0 0
          %846 = vmatprep.subr.bf16.mxu0 0
          %847 = vmatpush1.bf16.xpose.msra.mxu0 0
          %848 = vmatprep.mubr.bf16.mxu0 0
          %849 = vmatmul.mubr.bf16.gmra.mrb[0].mxu0 %v811
          %v850 = vpop.f32.mrb[0].mxu0
          %v851 = vadd.f32 0.0, %v850
          %v852 = vpop.f32.mrb[0].mxu0
          %v853 = vpop.f32.mrb[0].mxu0
          %v854 = vpop.f32.mrb[0].mxu0
          %855 = vdwg.mxu0
          %v856 = vsel %vm671, %v713, -inf
          %857 = vmax.xlane.f32.xlu0 %v856
          %v858 = vpop.xlane.xlu0 %857
          %v859 = vsel %vm671, %v759, -inf
          %860 = vmax.xlane.f32.xlu0 %v859
          %v861 = vpop.xlane.xlu0 %860
          %v862 = vsel %vm671, %v805, -inf
          %863 = vmax.xlane.f32.xlu0 %v862
          %v864 = vpop.xlane.xlu0 %863
          %v865 = vsel %vm671, %v851, -inf
          %866 = vmax.xlane.f32.xlu0 %v865
          %v867 = vpop.xlane.xlu0 %866
          %v868 = vmax.f32 %v644, %v858
          %v869 = vmax.f32 %v645, %v861
          %v870 = vmax.f32 %v646, %v864
          %v871 = vmax.f32 %v647, %v867
          %v872 = vsub.f32 %v644, %v868
          %v873 = vsub.f32 %v645, %v869
          %v874 = vsub.f32 %v646, %v870
          %v875 = vsub.f32 %v647, %v871
          %v876 = vmul.f32 %v872, 1.442695
          %v877 = vpow.pop %v876
          %v878 = vmul.f32 %v873, 1.442695
          %v879 = vpow.pop %v878
          %v880 = vmul.f32 %v874, 1.442695
          %v881 = vpow.pop %v880
          %v882 = vmul.f32 %v875, 1.442695
          %v883 = vpow.pop %v882
          %v884 = vsub.f32 %v713, %v868
          %v885 = vsub.f32 %v759, %v869
          %v886 = vsub.f32 %v805, %v870
          %v887 = vsub.f32 %v851, %v871
          %v888 = vmul.f32 %v884, 1.442695
          %v889 = vpow.pop %v888
          %v890 = vmul.f32 %v885, 1.442695
          %v891 = vpow.pop %v890
          %v892 = vmul.f32 %v886, 1.442695
          %v893 = vpow.pop %v892
          %v894 = vmul.f32 %v887, 1.442695
          %v895 = vpow.pop %v894
          %v896 = vmul.f32 %v877, %v648
          %v897 = vmul.f32 %v879, %v649
          %v898 = vmul.f32 %v881, %v650
          %v899 = vmul.f32 %v883, %v651
          %v900 = vsel %vm671, %v889, 0.0
          %901 = vadd.xlane.f32.xlu0 %v900
          %v902 = vpop.xlane.xlu0 %901
          %v903 = vsel %vm671, %v891, 0.0
          %904 = vadd.xlane.f32.xlu0 %v903
          %v905 = vpop.xlane.xlu0 %904
          %v906 = vsel %vm671, %v893, 0.0
          %907 = vadd.xlane.f32.xlu0 %v906
          %v908 = vpop.xlane.xlu0 %907
          %v909 = vsel %vm671, %v895, 0.0
          %910 = vadd.xlane.f32.xlu0 %v909
          %v911 = vpop.xlane.xlu0 %910
          %v912 = vadd.f32 %v896, %v902
          %v913 = vadd.f32 %v897, %v905
          %v914 = vadd.f32 %v898, %v908
          %v915 = vadd.f32 %v899, %v911
          %v916 = vpack.c.bf16 %v889, %v889
          %v917 = vpack.c.bf16 %v891, %v891
          %v918 = vpack.c.bf16 %v893, %v893
          %v919 = vpack.c.bf16 %v895, %v895
          %v921 = vsel %vm671, %v916, 0
          %vm923 = vcmask 1043456
          %v925 = vsel %vm923, %v667, 0
          %927 = vmatprep.subr.bf16.mxu0 0
          %928 = vmatpush1.bf16.msra.mxu0 %v925
          %929 = vmatprep.subr.bf16.mxu0 0
          %930 = vmatpush1.bf16.msra.mxu0 0
          %931 = vmatprep.subr.bf16.mxu0 0
          %932 = vmatpush1.bf16.msra.mxu0 0
          %933 = vmatprep.subr.bf16.mxu0 0
          %934 = vmatpush1.bf16.msra.mxu0 0
          %935 = vmatprep.subr.bf16.mxu0 0
          %936 = vmatpush1.bf16.msra.mxu0 0
          %937 = vmatprep.subr.bf16.mxu0 0
          %938 = vmatpush1.bf16.msra.mxu0 0
          %939 = vmatprep.subr.bf16.mxu0 0
          %940 = vmatpush1.bf16.msra.mxu0 0
          %941 = vmatprep.subr.bf16.mxu0 0
          %942 = vmatpush1.bf16.msra.mxu0 0
          %943 = vmatprep.subr.bf16.mxu0 0
          %944 = vmatpush1.bf16.msra.mxu0 0
          %945 = vmatprep.subr.bf16.mxu0 0
          %946 = vmatpush1.bf16.msra.mxu0 0
          %947 = vmatprep.subr.bf16.mxu0 0
          %948 = vmatpush1.bf16.msra.mxu0 0
          %949 = vmatprep.subr.bf16.mxu0 0
          %950 = vmatpush1.bf16.msra.mxu0 0
          %951 = vmatprep.subr.bf16.mxu0 0
          %952 = vmatpush1.bf16.msra.mxu0 0
          %953 = vmatprep.subr.bf16.mxu0 0
          %954 = vmatpush1.bf16.msra.mxu0 0
          %955 = vmatprep.subr.bf16.mxu0 0
          %956 = vmatpush1.bf16.msra.mxu0 0
          %957 = vmatprep.subr.bf16.mxu0 0
          %958 = vmatpush1.bf16.msra.mxu0 0
          %959 = vmatprep.mubr.bf16.mxu0 0
          %960 = vmatmul.mubr.bf16.gmra.mrb[0].mxu0 %v921
          %v961 = vpop.f32.mrb[0].mxu0
          %v962 = vadd.f32 0.0, %v961
          %v963 = vpop.f32.mrb[0].mxu0
          %v964 = vpop.f32.mrb[0].mxu0
          %v965 = vpop.f32.mrb[0].mxu0
          %966 = vdwg.mxu0
          %v968 = vsel %vm671, %v917, 0
          %v971 = vsel %vm923, %v668, 0
          %973 = vmatprep.subr.bf16.mxu0 0
          %974 = vmatpush1.bf16.msra.mxu0 %v971
          %975 = vmatprep.subr.bf16.mxu0 0
          %976 = vmatpush1.bf16.msra.mxu0 0
          %977 = vmatprep.subr.bf16.mxu0 0
          %978 = vmatpush1.bf16.msra.mxu0 0
          %979 = vmatprep.subr.bf16.mxu0 0
          %980 = vmatpush1.bf16.msra.mxu0 0
          %981 = vmatprep.subr.bf16.mxu0 0
          %982 = vmatpush1.bf16.msra.mxu0 0
          %983 = vmatprep.subr.bf16.mxu0 0
          %984 = vmatpush1.bf16.msra.mxu0 0
          %985 = vmatprep.subr.bf16.mxu0 0
          %986 = vmatpush1.bf16.msra.mxu0 0
          %987 = vmatprep.subr.bf16.mxu0 0
          %988 = vmatpush1.bf16.msra.mxu0 0
          %989 = vmatprep.subr.bf16.mxu0 0
          %990 = vmatpush1.bf16.msra.mxu0 0
          %991 = vmatprep.subr.bf16.mxu0 0
          %992 = vmatpush1.bf16.msra.mxu0 0
          %993 = vmatprep.subr.bf16.mxu0 0
          %994 = vmatpush1.bf16.msra.mxu0 0
          %995 = vmatprep.subr.bf16.mxu0 0
          %996 = vmatpush1.bf16.msra.mxu0 0
          %997 = vmatprep.subr.bf16.mxu0 0
          %998 = vmatpush1.bf16.msra.mxu0 0
          %999 = vmatprep.subr.bf16.mxu0 0
          %1000 = vmatpush1.bf16.msra.mxu0 0
          %1001 = vmatprep.subr.bf16.mxu0 0
          %1002 = vmatpush1.bf16.msra.mxu0 0
          %1003 = vmatprep.subr.bf16.mxu0 0
          %1004 = vmatpush1.bf16.msra.mxu0 0
          %1005 = vmatprep.mubr.bf16.mxu0 0
          %1006 = vmatmul.mubr.bf16.gmra.mrb[0].mxu0 %v968
          %v1007 = vpop.f32.mrb[0].mxu0
          %v1008 = vadd.f32 0.0, %v1007
          %v1009 = vpop.f32.mrb[0].mxu0
          %v1010 = vpop.f32.mrb[0].mxu0
          %v1011 = vpop.f32.mrb[0].mxu0
          %1012 = vdwg.mxu0
          %v1014 = vsel %vm671, %v918, 0
          %v1017 = vsel %vm923, %v669, 0
          %1019 = vmatprep.subr.bf16.mxu0 0
          %1020 = vmatpush1.bf16.msra.mxu0 %v1017
          %1021 = vmatprep.subr.bf16.mxu0 0
          %1022 = vmatpush1.bf16.msra.mxu0 0
          %1023 = vmatprep.subr.bf16.mxu0 0
          %1024 = vmatpush1.bf16.msra.mxu0 0
          %1025 = vmatprep.subr.bf16.mxu0 0
          %1026 = vmatpush1.bf16.msra.mxu0 0
          %1027 = vmatprep.subr.bf16.mxu0 0
          %1028 = vmatpush1.bf16.msra.mxu0 0
          %1029 = vmatprep.subr.bf16.mxu0 0
          %1030 = vmatpush1.bf16.msra.mxu0 0
          %1031 = vmatprep.subr.bf16.mxu0 0
          %1032 = vmatpush1.bf16.msra.mxu0 0
          %1033 = vmatprep.subr.bf16.mxu0 0
          %1034 = vmatpush1.bf16.msra.mxu0 0
          %1035 = vmatprep.subr.bf16.mxu0 0
          %1036 = vmatpush1.bf16.msra.mxu0 0
          %1037 = vmatprep.subr.bf16.mxu0 0
          %1038 = vmatpush1.bf16.msra.mxu0 0
          %1039 = vmatprep.subr.bf16.mxu0 0
          %1040 = vmatpush1.bf16.msra.mxu0 0
          %1041 = vmatprep.subr.bf16.mxu0 0
          %1042 = vmatpush1.bf16.msra.mxu0 0
          %1043 = vmatprep.subr.bf16.mxu0 0
          %1044 = vmatpush1.bf16.msra.mxu0 0
          %1045 = vmatprep.subr.bf16.mxu0 0
          %1046 = vmatpush1.bf16.msra.mxu0 0
          %1047 = vmatprep.subr.bf16.mxu0 0
          %1048 = vmatpush1.bf16.msra.mxu0 0
          %1049 = vmatprep.subr.bf16.mxu0 0
          %1050 = vmatpush1.bf16.msra.mxu0 0
          %1051 = vmatprep.mubr.bf16.mxu0 0
          %1052 = vmatmul.mubr.bf16.gmra.mrb[0].mxu0 %v1014
          %v1053 = vpop.f32.mrb[0].mxu0
          %v1054 = vadd.f32 0.0, %v1053
          %v1055 = vpop.f32.mrb[0].mxu0
          %v1056 = vpop.f32.mrb[0].mxu0
          %v1057 = vpop.f32.mrb[0].mxu0
          %1058 = vdwg.mxu0
          %v1060 = vsel %vm671, %v919, 0
          %v1063 = vsel %vm923, %v670, 0
          %1065 = vmatprep.subr.bf16.mxu0 0
          %1066 = vmatpush1.bf16.msra.mxu0 %v1063
          %1067 = vmatprep.subr.bf16.mxu0 0
          %1068 = vmatpush1.bf16.msra.mxu0 0
          %1069 = vmatprep.subr.bf16.mxu0 0
          %1070 = vmatpush1.bf16.msra.mxu0 0
          %1071 = vmatprep.subr.bf16.mxu0 0
          %1072 = vmatpush1.bf16.msra.mxu0 0
          %1073 = vmatprep.subr.bf16.mxu0 0
          %1074 = vmatpush1.bf16.msra.mxu0 0
          %1075 = vmatprep.subr.bf16.mxu0 0
          %1076 = vmatpush1.bf16.msra.mxu0 0
          %1077 = vmatprep.subr.bf16.mxu0 0
          %1078 = vmatpush1.bf16.msra.mxu0 0
          %1079 = vmatprep.subr.bf16.mxu0 0
          %1080 = vmatpush1.bf16.msra.mxu0 0
          %1081 = vmatprep.subr.bf16.mxu0 0
          %1082 = vmatpush1.bf16.msra.mxu0 0
          %1083 = vmatprep.subr.bf16.mxu0 0
          %1084 = vmatpush1.bf16.msra.mxu0 0
          %1085 = vmatprep.subr.bf16.mxu0 0
          %1086 = vmatpush1.bf16.msra.mxu0 0
          %1087 = vmatprep.subr.bf16.mxu0 0
          %1088 = vmatpush1.bf16.msra.mxu0 0
          %1089 = vmatprep.subr.bf16.mxu0 0
          %1090 = vmatpush1.bf16.msra.mxu0 0
          %1091 = vmatprep.subr.bf16.mxu0 0
          %1092 = vmatpush1.bf16.msra.mxu0 0
          %1093 = vmatprep.subr.bf16.mxu0 0
          %1094 = vmatpush1.bf16.msra.mxu0 0
          %1095 = vmatprep.subr.bf16.mxu0 0
          %1096 = vmatpush1.bf16.msra.mxu0 0
          %1097 = vmatprep.mubr.bf16.mxu0 0
          %1098 = vmatmul.mubr.bf16.gmra.mrb[0].mxu0 %v1060
          %v1099 = vpop.f32.mrb[0].mxu0
          %v1100 = vadd.f32 0.0, %v1099
          %v1101 = vpop.f32.mrb[0].mxu0
          %v1102 = vpop.f32.mrb[0].mxu0
          %v1103 = vpop.f32.mrb[0].mxu0
          %1104 = vdwg.mxu0
          %v1105 = vmul.f32 %v877, %v652
          %v1106 = vmul.f32 %v879, %v653
          %v1107 = vmul.f32 %v881, %v654
          %v1108 = vmul.f32 %v883, %v655
          %v1109 = vadd.f32 %v1105, %v962
          %v1110 = vadd.f32 %v1106, %v1008
          %v1111 = vadd.f32 %v1107, %v1054
          %v1112 = vadd.f32 %v1108, %v1100
        $region77: #{tpu_custom_call.1} parent=71 // loop_footer
          %s641 = sadd.s32 %s639, 1
        $region78: #{tpu_custom_call.1} parent=71 // loop_footer_branch
          %638 = sbr.rel target = $region74
        $region79: #{tpu_custom_call.1} parent=71 // loop_exit
          _
        %v1113 = vlaneseq
        %v1114 = vshrl.u32 %v1113, 7
        %v1115 = vlaneseq
        %v1116 = vand.u32 %v1115, 127
        %vm1117 = vcmp.ge.s32.totalorder %v1114, %v1116
        %v1118 = vld [vmem:[%s572] sm:$0xf]
        %v1119 = vld [vmem:[%s572 + $0x4] sm:$0xf]
        %v1120 = vld [vmem:[%s572 + $0x8] sm:$0xf]
        %v1121 = vld [vmem:[%s572 + $0xc] sm:$0xf]
        %v1122 = vld [vmem:[%s579] sm:$0xf]
        %v1123 = vld [vmem:[%s579 + $0x4] sm:$0xf]
        %v1124 = vld [vmem:[%s579 + $0x8] sm:$0xf]
        %v1125 = vld [vmem:[%s579 + $0xc] sm:$0xf]
        %vm1126 = vcmask 64512
        %v1128 = vsel %vm1126, %v634, 0
        %v1131 = vsel %vm1126, %v1118, 0
        %1133 = vmatprep.subr.bf16.mxu0 0
        %1134 = vmatpush1.bf16.xpose.msra.mxu0 %v1131
        %1135 = vmatprep.subr.bf16.mxu0 0
        %1136 = vmatpush1.bf16.xpose.msra.mxu0 0
        %1137 = vmatprep.subr.bf16.mxu0 0
        %1138 = vmatpush1.bf16.xpose.msra.mxu0 0
        %1139 = vmatprep.subr.bf16.mxu0 0
        %1140 = vmatpush1.bf16.xpose.msra.mxu0 0
        %1141 = vmatprep.subr.bf16.mxu0 0
        %1142 = vmatpush1.bf16.xpose.msra.mxu0 0
        %1143 = vmatprep.subr.bf16.mxu0 0
        %1144 = vmatpush1.bf16.xpose.msra.mxu0 0
        %1145 = vmatprep.subr.bf16.mxu0 0
        %1146 = vmatpush1.bf16.xpose.msra.mxu0 0
        %1147 = vmatprep.subr.bf16.mxu0 0
        %1148 = vmatpush1.bf16.xpose.msra.mxu0 0
        %1149 = vmatprep.subr.bf16.mxu0 0
        %1150 = vmatpush1.bf16.xpose.msra.mxu0 0
        %1151 = vmatprep.subr.bf16.mxu0 0
        %1152 = vmatpush1.bf16.xpose.msra.mxu0 0
        %1153 = vmatprep.subr.bf16.mxu0 0
        %1154 = vmatpush1.bf16.xpose.msra.mxu0 0
        %1155 = vmatprep.subr.bf16.mxu0 0
        %1156 = vmatpush1.bf16.xpose.msra.mxu0 0
        %1157 = vmatprep.subr.bf16.mxu0 0
        %1158 = vmatpush1.bf16.xpose.msra.mxu0 0
        %1159 = vmatprep.subr.bf16.mxu0 0
        %1160 = vmatpush1.bf16.xpose.msra.mxu0 0
        %1161 = vmatprep.subr.bf16.mxu0 0
        %1162 = vmatpush1.bf16.xpose.msra.mxu0 0
        %1163 = vmatprep.subr.bf16.mxu0 0
        %1164 = vmatpush1.bf16.xpose.msra.mxu0 0
        %1165 = vmatprep.mubr.bf16.mxu0 0
        %1166 = vmatmul.mubr.bf16.gmra.mrb[0].mxu0 %v1128
        %v1167 = vpop.f32.mrb[0].mxu0
        %v1168 = vadd.f32 0.0, %v1167
        %v1169 = vpop.f32.mrb[0].mxu0
        %v1170 = vpop.f32.mrb[0].mxu0
        %v1171 = vpop.f32.mrb[0].mxu0
        %1172 = vdwg.mxu0
        %v1174 = vsel %vm1126, %v635, 0
        %v1177 = vsel %vm1126, %v1119, 0
        %1179 = vmatprep.subr.bf16.mxu0 0
        %1180 = vmatpush1.bf16.xpose.msra.mxu0 %v1177
        %1181 = vmatprep.subr.bf16.mxu0 0
        %1182 = vmatpush1.bf16.xpose.msra.mxu0 0
        %1183 = vmatprep.subr.bf16.mxu0 0
        %1184 = vmatpush1.bf16.xpose.msra.mxu0 0
        %1185 = vmatprep.subr.bf16.mxu0 0
        %1186 = vmatpush1.bf16.xpose.msra.mxu0 0
        %1187 = vmatprep.subr.bf16.mxu0 0
        %1188 = vmatpush1.bf16.xpose.msra.mxu0 0
        %1189 = vmatprep.subr.bf16.mxu0 0
        %1190 = vmatpush1.bf16.xpose.msra.mxu0 0
        %1191 = vmatprep.subr.bf16.mxu0 0
        %1192 = vmatpush1.bf16.xpose.msra.mxu0 0
        %1193 = vmatprep.subr.bf16.mxu0 0
        %1194 = vmatpush1.bf16.xpose.msra.mxu0 0
        %1195 = vmatprep.subr.bf16.mxu0 0
        %1196 = vmatpush1.bf16.xpose.msra.mxu0 0
        %1197 = vmatprep.subr.bf16.mxu0 0
        %1198 = vmatpush1.bf16.xpose.msra.mxu0 0
        %1199 = vmatprep.subr.bf16.mxu0 0
        %1200 = vmatpush1.bf16.xpose.msra.mxu0 0
        %1201 = vmatprep.subr.bf16.mxu0 0
        %1202 = vmatpush1.bf16.xpose.msra.mxu0 0
        %1203 = vmatprep.subr.bf16.mxu0 0
        %1204 = vmatpush1.bf16.xpose.msra.mxu0 0
        %1205 = vmatprep.subr.bf16.mxu0 0
        %1206 = vmatpush1.bf16.xpose.msra.mxu0 0
        %1207 = vmatprep.subr.bf16.mxu0 0
        %1208 = vmatpush1.bf16.xpose.msra.mxu0 0
        %1209 = vmatprep.subr.bf16.mxu0 0
        %1210 = vmatpush1.bf16.xpose.msra.mxu0 0
        %1211 = vmatprep.mubr.bf16.mxu0 0
        %1212 = vmatmul.mubr.bf16.gmra.mrb[0].mxu0 %v1174
        %v1213 = vpop.f32.mrb[0].mxu0
        %v1214 = vadd.f32 0.0, %v1213
        %v1215 = vpop.f32.mrb[0].mxu0
        %v1216 = vpop.f32.mrb[0].mxu0
        %v1217 = vpop.f32.mrb[0].mxu0
        %1218 = vdwg.mxu0
        %v1220 = vsel %vm1126, %v636, 0
        %v1223 = vsel %vm1126, %v1120, 0
        %1225 = vmatprep.subr.bf16.mxu0 0
        %1226 = vmatpush1.bf16.xpose.msra.mxu0 %v1223
        %1227 = vmatprep.subr.bf16.mxu0 0
        %1228 = vmatpush1.bf16.xpose.msra.mxu0 0
        %1229 = vmatprep.subr.bf16.mxu0 0
        %1230 = vmatpush1.bf16.xpose.msra.mxu0 0
        %1231 = vmatprep.subr.bf16.mxu0 0
        %1232 = vmatpush1.bf16.xpose.msra.mxu0 0
        %1233 = vmatprep.subr.bf16.mxu0 0
        %1234 = vmatpush1.bf16.xpose.msra.mxu0 0
        %1235 = vmatprep.subr.bf16.mxu0 0
        %1236 = vmatpush1.bf16.xpose.msra.mxu0 0
        %1237 = vmatprep.subr.bf16.mxu0 0
        %1238 = vmatpush1.bf16.xpose.msra.mxu0 0
        %1239 = vmatprep.subr.bf16.mxu0 0
        %1240 = vmatpush1.bf16.xpose.msra.mxu0 0
        %1241 = vmatprep.subr.bf16.mxu0 0
        %1242 = vmatpush1.bf16.xpose.msra.mxu0 0
        %1243 = vmatprep.subr.bf16.mxu0 0
        %1244 = vmatpush1.bf16.xpose.msra.mxu0 0
        %1245 = vmatprep.subr.bf16.mxu0 0
        %1246 = vmatpush1.bf16.xpose.msra.mxu0 0
        %1247 = vmatprep.subr.bf16.mxu0 0
        %1248 = vmatpush1.bf16.xpose.msra.mxu0 0
        %1249 = vmatprep.subr.bf16.mxu0 0
        %1250 = vmatpush1.bf16.xpose.msra.mxu0 0
        %1251 = vmatprep.subr.bf16.mxu0 0
        %1252 = vmatpush1.bf16.xpose.msra.mxu0 0
        %1253 = vmatprep.subr.bf16.mxu0 0
        %1254 = vmatpush1.bf16.xpose.msra.mxu0 0
        %1255 = vmatprep.subr.bf16.mxu0 0
        %1256 = vmatpush1.bf16.xpose.msra.mxu0 0
        %1257 = vmatprep.mubr.bf16.mxu0 0
        %1258 = vmatmul.mubr.bf16.gmra.mrb[0].mxu0 %v1220
        %v1259 = vpop.f32.mrb[0].mxu0
        %v1260 = vadd.f32 0.0, %v1259
        %v1261 = vpop.f32.mrb[0].mxu0
        %v1262 = vpop.f32.mrb[0].mxu0
        %v1263 = vpop.f32.mrb[0].mxu0
        %1264 = vdwg.mxu0
        %v1266 = vsel %vm1126, %v637, 0
        %v1269 = vsel %vm1126, %v1121, 0
        %1271 = vmatprep.subr.bf16.mxu0 0
        %1272 = vmatpush1.bf16.xpose.msra.mxu0 %v1269
        %1273 = vmatprep.subr.bf16.mxu0 0
        %1274 = vmatpush1.bf16.xpose.msra.mxu0 0
        %1275 = vmatprep.subr.bf16.mxu0 0
        %1276 = vmatpush1.bf16.xpose.msra.mxu0 0
        %1277 = vmatprep.subr.bf16.mxu0 0
        %1278 = vmatpush1.bf16.xpose.msra.mxu0 0
        %1279 = vmatprep.subr.bf16.mxu0 0
        %1280 = vmatpush1.bf16.xpose.msra.mxu0 0
        %1281 = vmatprep.subr.bf16.mxu0 0
        %1282 = vmatpush1.bf16.xpose.msra.mxu0 0
        %1283 = vmatprep.subr.bf16.mxu0 0
        %1284 = vmatpush1.bf16.xpose.msra.mxu0 0
        %1285 = vmatprep.subr.bf16.mxu0 0
        %1286 = vmatpush1.bf16.xpose.msra.mxu0 0
        %1287 = vmatprep.subr.bf16.mxu0 0
        %1288 = vmatpush1.bf16.xpose.msra.mxu0 0
        %1289 = vmatprep.subr.bf16.mxu0 0
        %1290 = vmatpush1.bf16.xpose.msra.mxu0 0
        %1291 = vmatprep.subr.bf16.mxu0 0
        %1292 = vmatpush1.bf16.xpose.msra.mxu0 0
        %1293 = vmatprep.subr.bf16.mxu0 0
        %1294 = vmatpush1.bf16.xpose.msra.mxu0 0
        %1295 = vmatprep.subr.bf16.mxu0 0
        %1296 = vmatpush1.bf16.xpose.msra.mxu0 0
        %1297 = vmatprep.subr.bf16.mxu0 0
        %1298 = vmatpush1.bf16.xpose.msra.mxu0 0
        %1299 = vmatprep.subr.bf16.mxu0 0
        %1300 = vmatpush1.bf16.xpose.msra.mxu0 0
        %1301 = vmatprep.subr.bf16.mxu0 0
        %1302 = vmatpush1.bf16.xpose.msra.mxu0 0
        %1303 = vmatprep.mubr.bf16.mxu0 0
        %1304 = vmatmul.mubr.bf16.gmra.mrb[0].mxu0 %v1266
        %v1305 = vpop.f32.mrb[0].mxu0
        %v1306 = vadd.f32 0.0, %v1305
        %v1307 = vpop.f32.mrb[0].mxu0
        %v1308 = vpop.f32.mrb[0].mxu0
        %v1309 = vpop.f32.mrb[0].mxu0
        %1310 = vdwg.mxu0
        %v1311 = vsel %vm1117, 1, 0
        %vm1312 = vcmp.eq.s32.totalorder %v1311, 1
        %v1313 = vsel %vm1312, %v1168, -1e+30
        %v1314 = vsel %vm1312, %v1214, -1e+30
        %v1315 = vsel %vm1312, %v1260, -1e+30
        %v1316 = vsel %vm1312, %v1306, -1e+30
        %v1317 = vsel %vm1126, %v1313, -inf
        %1318 = vmax.xlane.f32.xlu0 %v1317
        %v1319 = vpop.xlane.xlu0 %1318
        %v1320 = vsel %vm1126, %v1314, -inf
        %1321 = vmax.xlane.f32.xlu0 %v1320
        %v1322 = vpop.xlane.xlu0 %1321
        %v1323 = vsel %vm1126, %v1315, -inf
        %1324 = vmax.xlane.f32.xlu0 %v1323
        %v1325 = vpop.xlane.xlu0 %1324
        %v1326 = vsel %vm1126, %v1316, -inf
        %1327 = vmax.xlane.f32.xlu0 %v1326
        %v1328 = vpop.xlane.xlu0 %1327
        %v1329 = vmax.f32 %v644, %v1319
        %v1330 = vmax.f32 %v645, %v1322
        %v1331 = vmax.f32 %v646, %v1325
        %v1332 = vmax.f32 %v647, %v1328
        %v1333 = vsub.f32 %v644, %v1329
        %v1334 = vsub.f32 %v645, %v1330
        %v1335 = vsub.f32 %v646, %v1331
        %v1336 = vsub.f32 %v647, %v1332
        %v1337 = vmul.f32 %v1333, 1.442695
        %v1338 = vpow.pop %v1337
        %v1339 = vmul.f32 %v1334, 1.442695
        %v1340 = vpow.pop %v1339
        %v1341 = vmul.f32 %v1335, 1.442695
        %v1342 = vpow.pop %v1341
        %v1343 = vmul.f32 %v1336, 1.442695
        %v1344 = vpow.pop %v1343
        %v1345 = vsub.f32 %v1313, %v1329
        %v1346 = vsub.f32 %v1314, %v1330
        %v1347 = vsub.f32 %v1315, %v1331
        %v1348 = vsub.f32 %v1316, %v1332
        %v1349 = vmul.f32 %v1345, 1.442695
        %v1350 = vpow.pop %v1349
        %v1351 = vmul.f32 %v1346, 1.442695
        %v1352 = vpow.pop %v1351
        %v1353 = vmul.f32 %v1347, 1.442695
        %v1354 = vpow.pop %v1353
        %v1355 = vmul.f32 %v1348, 1.442695
        %v1356 = vpow.pop %v1355
        %v1357 = vmul.f32 %v1338, %v648
        %v1358 = vmul.f32 %v1340, %v649
        %v1359 = vmul.f32 %v1342, %v650
        %v1360 = vmul.f32 %v1344, %v651
        %v1361 = vsel %vm1126, %v1350, 0.0
        %1362 = vadd.xlane.f32.xlu0 %v1361
        %v1363 = vpop.xlane.xlu0 %1362
        %v1364 = vsel %vm1126, %v1352, 0.0
        %1365 = vadd.xlane.f32.xlu0 %v1364
        %v1366 = vpop.xlane.xlu0 %1365
        %v1367 = vsel %vm1126, %v1354, 0.0
        %1368 = vadd.xlane.f32.xlu0 %v1367
        %v1369 = vpop.xlane.xlu0 %1368
        %v1370 = vsel %vm1126, %v1356, 0.0
        %1371 = vadd.xlane.f32.xlu0 %v1370
        %v1372 = vpop.xlane.xlu0 %1371
        %v1373 = vadd.f32 %v1357, %v1363
        %v1374 = vadd.f32 %v1358, %v1366
        %v1375 = vadd.f32 %v1359, %v1369
        %v1376 = vadd.f32 %v1360, %v1372
        %v1377 = vpack.c.bf16 %v1350, %v1350
        %v1378 = vpack.c.bf16 %v1352, %v1352
        %v1379 = vpack.c.bf16 %v1354, %v1354
        %v1380 = vpack.c.bf16 %v1356, %v1356
        %v1382 = vsel %vm1126, %v1377, 0
        %vm1384 = vcmask 1043456
        %v1386 = vsel %vm1384, %v1122, 0
        %1388 = vmatprep.subr.bf16.mxu0 0
        %1389 = vmatpush1.bf16.msra.mxu0 %v1386
        %1390 = vmatprep.subr.bf16.mxu0 0
        %1391 = vmatpush1.bf16.msra.mxu0 0
        %1392 = vmatprep.subr.bf16.mxu0 0
        %1393 = vmatpush1.bf16.msra.mxu0 0
        %1394 = vmatprep.subr.bf16.mxu0 0
        %1395 = vmatpush1.bf16.msra.mxu0 0
        %1396 = vmatprep.subr.bf16.mxu0 0
        %1397 = vmatpush1.bf16.msra.mxu0 0
        %1398 = vmatprep.subr.bf16.mxu0 0
        %1399 = vmatpush1.bf16.msra.mxu0 0
        %1400 = vmatprep.subr.bf16.mxu0 0
        %1401 = vmatpush1.bf16.msra.mxu0 0
        %1402 = vmatprep.subr.bf16.mxu0 0
        %1403 = vmatpush1.bf16.msra.mxu0 0
        %1404 = vmatprep.subr.bf16.mxu0 0
        %1405 = vmatpush1.bf16.msra.mxu0 0
        %1406 = vmatprep.subr.bf16.mxu0 0
        %1407 = vmatpush1.bf16.msra.mxu0 0
        %1408 = vmatprep.subr.bf16.mxu0 0
        %1409 = vmatpush1.bf16.msra.mxu0 0
        %1410 = vmatprep.subr.bf16.mxu0 0
        %1411 = vmatpush1.bf16.msra.mxu0 0
        %1412 = vmatprep.subr.bf16.mxu0 0
        %1413 = vmatpush1.bf16.msra.mxu0 0
        %1414 = vmatprep.subr.bf16.mxu0 0
        %1415 = vmatpush1.bf16.msra.mxu0 0
        %1416 = vmatprep.subr.bf16.mxu0 0
        %1417 = vmatpush1.bf16.msra.mxu0 0
        %1418 = vmatprep.subr.bf16.mxu0 0
        %1419 = vmatpush1.bf16.msra.mxu0 0
        %1420 = vmatprep.mubr.bf16.mxu0 0
        %1421 = vmatmul.mubr.bf16.gmra.mrb[0].mxu0 %v1382
        %v1422 = vpop.f32.mrb[0].mxu0
        %v1423 = vadd.f32 0.0, %v1422
        %v1424 = vpop.f32.mrb[0].mxu0
        %v1425 = vpop.f32.mrb[0].mxu0
        %v1426 = vpop.f32.mrb[0].mxu0
        %1427 = vdwg.mxu0
        %v1429 = vsel %vm1126, %v1378, 0
        %v1432 = vsel %vm1384, %v1123, 0
        %1434 = vmatprep.subr.bf16.mxu0 0
        %1435 = vmatpush1.bf16.msra.mxu0 %v1432
        %1436 = vmatprep.subr.bf16.mxu0 0
        %1437 = vmatpush1.bf16.msra.mxu0 0
        %1438 = vmatprep.subr.bf16.mxu0 0
        %1439 = vmatpush1.bf16.msra.mxu0 0
        %1440 = vmatprep.subr.bf16.mxu0 0
        %1441 = vmatpush1.bf16.msra.mxu0 0
        %1442 = vmatprep.subr.bf16.mxu0 0
        %1443 = vmatpush1.bf16.msra.mxu0 0
        %1444 = vmatprep.subr.bf16.mxu0 0
        %1445 = vmatpush1.bf16.msra.mxu0 0
        %1446 = vmatprep.subr.bf16.mxu0 0
        %1447 = vmatpush1.bf16.msra.mxu0 0
        %1448 = vmatprep.subr.bf16.mxu0 0
        %1449 = vmatpush1.bf16.msra.mxu0 0
        %1450 = vmatprep.subr.bf16.mxu0 0
        %1451 = vmatpush1.bf16.msra.mxu0 0
        %1452 = vmatprep.subr.bf16.mxu0 0
        %1453 = vmatpush1.bf16.msra.mxu0 0
        %1454 = vmatprep.subr.bf16.mxu0 0
        %1455 = vmatpush1.bf16.msra.mxu0 0
        %1456 = vmatprep.subr.bf16.mxu0 0
        %1457 = vmatpush1.bf16.msra.mxu0 0
        %1458 = vmatprep.subr.bf16.mxu0 0
        %1459 = vmatpush1.bf16.msra.mxu0 0
        %1460 = vmatprep.subr.bf16.mxu0 0
        %1461 = vmatpush1.bf16.msra.mxu0 0
        %1462 = vmatprep.subr.bf16.mxu0 0
        %1463 = vmatpush1.bf16.msra.mxu0 0
        %1464 = vmatprep.subr.bf16.mxu0 0
        %1465 = vmatpush1.bf16.msra.mxu0 0
        %1466 = vmatprep.mubr.bf16.mxu0 0
        %1467 = vmatmul.mubr.bf16.gmra.mrb[0].mxu0 %v1429
        %v1468 = vpop.f32.mrb[0].mxu0
        %v1469 = vadd.f32 0.0, %v1468
        %v1470 = vpop.f32.mrb[0].mxu0
        %v1471 = vpop.f32.mrb[0].mxu0
        %v1472 = vpop.f32.mrb[0].mxu0
        %1473 = vdwg.mxu0
        %v1475 = vsel %vm1126, %v1379, 0
        %v1478 = vsel %vm1384, %v1124, 0
        %1480 = vmatprep.subr.bf16.mxu0 0
        %1481 = vmatpush1.bf16.msra.mxu0 %v1478
        %1482 = vmatprep.subr.bf16.mxu0 0
        %1483 = vmatpush1.bf16.msra.mxu0 0
        %1484 = vmatprep.subr.bf16.mxu0 0
        %1485 = vmatpush1.bf16.msra.mxu0 0
        %1486 = vmatprep.subr.bf16.mxu0 0
        %1487 = vmatpush1.bf16.msra.mxu0 0
        %1488 = vmatprep.subr.bf16.mxu0 0
        %1489 = vmatpush1.bf16.msra.mxu0 0
        %1490 = vmatprep.subr.bf16.mxu0 0
        %1491 = vmatpush1.bf16.msra.mxu0 0
        %1492 = vmatprep.subr.bf16.mxu0 0
        %1493 = vmatpush1.bf16.msra.mxu0 0
        %1494 = vmatprep.subr.bf16.mxu0 0
        %1495 = vmatpush1.bf16.msra.mxu0 0
        %1496 = vmatprep.subr.bf16.mxu0 0
        %1497 = vmatpush1.bf16.msra.mxu0 0
        %1498 = vmatprep.subr.bf16.mxu0 0
        %1499 = vmatpush1.bf16.msra.mxu0 0
        %1500 = vmatprep.subr.bf16.mxu0 0
        %1501 = vmatpush1.bf16.msra.mxu0 0
        %1502 = vmatprep.subr.bf16.mxu0 0
        %1503 = vmatpush1.bf16.msra.mxu0 0
        %1504 = vmatprep.subr.bf16.mxu0 0
        %1505 = vmatpush1.bf16.msra.mxu0 0
        %1506 = vmatprep.subr.bf16.mxu0 0
        %1507 = vmatpush1.bf16.msra.mxu0 0
        %1508 = vmatprep.subr.bf16.mxu0 0
        %1509 = vmatpush1.bf16.msra.mxu0 0
        %1510 = vmatprep.subr.bf16.mxu0 0
        %1511 = vmatpush1.bf16.msra.mxu0 0
        %1512 = vmatprep.mubr.bf16.mxu0 0
        %1513 = vmatmul.mubr.bf16.gmra.mrb[0].mxu0 %v1475
        %v1514 = vpop.f32.mrb[0].mxu0
        %v1515 = vadd.f32 0.0, %v1514
        %v1516 = vpop.f32.mrb[0].mxu0
        %v1517 = vpop.f32.mrb[0].mxu0
        %v1518 = vpop.f32.mrb[0].mxu0
        %1519 = vdwg.mxu0
        %v1521 = vsel %vm1126, %v1380, 0
        %v1524 = vsel %vm1384, %v1125, 0
        %1526 = vmatprep.subr.bf16.mxu0 0
        %1527 = vmatpush1.bf16.msra.mxu0 %v1524
        %1528 = vmatprep.subr.bf16.mxu0 0
        %1529 = vmatpush1.bf16.msra.mxu0 0
        %1530 = vmatprep.subr.bf16.mxu0 0
        %1531 = vmatpush1.bf16.msra.mxu0 0
        %1532 = vmatprep.subr.bf16.mxu0 0
        %1533 = vmatpush1.bf16.msra.mxu0 0
        %1534 = vmatprep.subr.bf16.mxu0 0
        %1535 = vmatpush1.bf16.msra.mxu0 0
        %1536 = vmatprep.subr.bf16.mxu0 0
        %1537 = vmatpush1.bf16.msra.mxu0 0
        %1538 = vmatprep.subr.bf16.mxu0 0
        %1539 = vmatpush1.bf16.msra.mxu0 0
        %1540 = vmatprep.subr.bf16.mxu0 0
        %1541 = vmatpush1.bf16.msra.mxu0 0
        %1542 = vmatprep.subr.bf16.mxu0 0
        %1543 = vmatpush1.bf16.msra.mxu0 0
        %1544 = vmatprep.subr.bf16.mxu0 0
        %1545 = vmatpush1.bf16.msra.mxu0 0
        %1546 = vmatprep.subr.bf16.mxu0 0
        %1547 = vmatpush1.bf16.msra.mxu0 0
        %1548 = vmatprep.subr.bf16.mxu0 0
        %1549 = vmatpush1.bf16.msra.mxu0 0
        %1550 = vmatprep.subr.bf16.mxu0 0
        %1551 = vmatpush1.bf16.msra.mxu0 0
        %1552 = vmatprep.subr.bf16.mxu0 0
        %1553 = vmatpush1.bf16.msra.mxu0 0
        %1554 = vmatprep.subr.bf16.mxu0 0
        %1555 = vmatpush1.bf16.msra.mxu0 0
        %1556 = vmatprep.subr.bf16.mxu0 0
        %1557 = vmatpush1.bf16.msra.mxu0 0
        %1558 = vmatprep.mubr.bf16.mxu0 0
        %1559 = vmatmul.mubr.bf16.gmra.mrb[0].mxu0 %v1521
        %v1560 = vpop.f32.mrb[0].mxu0
        %v1561 = vadd.f32 0.0, %v1560
        %v1562 = vpop.f32.mrb[0].mxu0
        %v1563 = vpop.f32.mrb[0].mxu0
        %v1564 = vpop.f32.mrb[0].mxu0
        %1565 = vdwg.mxu0
        %v1566 = vmul.f32 %v1338, %v652
        %v1567 = vmul.f32 %v1340, %v653
        %v1568 = vmul.f32 %v1342, %v654
        %v1569 = vmul.f32 %v1344, %v655
        %v1570 = vadd.f32 %v1566, %v1423
        %v1571 = vadd.f32 %v1567, %v1469
        %v1572 = vadd.f32 %v1568, %v1515
        %v1573 = vadd.f32 %v1569, %v1561
        %v1574 = vrcp.pop %v1373
        %v1575 = vrcp.pop %v1374
        %v1576 = vrcp.pop %v1375
        %v1577 = vrcp.pop %v1376
        %v1578 = vmul.f32 %v1570, %v1574
        %v1579 = vmul.f32 %v1571, %v1575
        %v1580 = vmul.f32 %v1572, %v1576
        %v1581 = vmul.f32 %v1573, %v1577
        %1583 = vrot.lane.b32.xlu0 %v1579, 8
        %v1584 = vpop.permute.xlu0 %1583
        %1587 = vrot.lane.b32.xlu0 %v1580, 16
        %v1588 = vpop.permute.xlu0 %1587
        %1591 = vrot.lane.b32.xlu0 %v1581, 24
        %v1592 = vpop.permute.xlu0 %1591
        %v1594 = vsel %vm1126, %v1578, %v1584
        %vm1595 = vcmask 130048
        %v1596 = vsel %vm1595, %v1594, %v1588
        %vm1597 = vcmask 195584
        %v1598 = vsel %vm1597, %v1596, %v1592
        %v1599 = vld [vmem:[%s5] sm:$0xf]
        %v1600 = vld [vmem:[%s5 + $0x4] sm:$0xf]
        %v1601 = vld [vmem:[%s5 + $0x8] sm:$0xf]
        %v1602 = vld [vmem:[%s5 + $0xc] sm:$0xf]
        %v1603 = vpack.c.bf16 %v1598, %v1598
        %v1608 = vunpack.c.l.b16 %v1599
        %v1609 = vunpack.c.l.b16 %v1600
        %v1610 = vunpack.c.l.b16 %v1601
        %v1611 = vunpack.c.l.b16 %v1602
        %v1612 = vpack.c.b16 %v1609, %v1608
        %v1613 = vpack.c.b16 %v1611, %v1610
        %v1617 = vsel %vm466, %v1603, 0
        %1619 = vmatprep.subr.bf16.mxu0 0
        %1620 = vmatpush1.bf16.msra.mxu0 %v1612
        %1621 = vmatprep.subr.bf16.mxu0 0
        %1622 = vmatpush1.bf16.msra.mxu0 %v1613
        %1623 = vmatprep.subr.bf16.mxu0 0
        %1624 = vmatpush1.bf16.msra.mxu0 0
        %1625 = vmatprep.subr.bf16.mxu0 0
        %1626 = vmatpush1.bf16.msra.mxu0 0
        %1627 = vmatprep.subr.bf16.mxu0 0
        %1628 = vmatpush1.bf16.msra.mxu0 0
        %1629 = vmatprep.subr.bf16.mxu0 0
        %1630 = vmatpush1.bf16.msra.mxu0 0
        %1631 = vmatprep.subr.bf16.mxu0 0
        %1632 = vmatpush1.bf16.msra.mxu0 0
        %1633 = vmatprep.subr.bf16.mxu0 0
        %1634 = vmatpush1.bf16.msra.mxu0 0
        %1635 = vmatprep.subr.bf16.mxu0 0
        %1636 = vmatpush1.bf16.msra.mxu0 0
        %1637 = vmatprep.subr.bf16.mxu0 0
        %1638 = vmatpush1.bf16.msra.mxu0 0
        %1639 = vmatprep.subr.bf16.mxu0 0
        %1640 = vmatpush1.bf16.msra.mxu0 0
        %1641 = vmatprep.subr.bf16.mxu0 0
        %1642 = vmatpush1.bf16.msra.mxu0 0
        %1643 = vmatprep.subr.bf16.mxu0 0
        %1644 = vmatpush1.bf16.msra.mxu0 0
        %1645 = vmatprep.subr.bf16.mxu0 0
        %1646 = vmatpush1.bf16.msra.mxu0 0
        %1647 = vmatprep.subr.bf16.mxu0 0
        %1648 = vmatpush1.bf16.msra.mxu0 0
        %1649 = vmatprep.subr.bf16.mxu0 0
        %1650 = vmatpush1.bf16.msra.mxu0 0
        %1651 = vmatprep.mubr.bf16.mxu0 0
        %1652 = vmatmul.mubr.bf16.gmra.mrb[0].mxu0 %v1617
        %v1653 = vpop.f32.mrb[0].mxu0
        %v1654 = vadd.f32 0.0, %v1653
        %v1655 = vpop.f32.mrb[0].mxu0
        %v1656 = vpop.f32.mrb[0].mxu0
        %v1657 = vpop.f32.mrb[0].mxu0
        %1658 = vdwg.mxu0
        %v1659 = vadd.f32 %v463, %v1654
        %v1660 = vld [vmem:[%s6] sm:$0x1]
        %v1662 = vlaneseq
        %v1663 = vshrl.u32 %v1662, 7
        %v1664 = vsub.s32 0, %v1663
        %v1665 = vrot.slane %v1660, %v1664
        %v1667 = vadd.f32 %v1659, %v1665
        %v1668 = vld [vmem:[%s7] sm:$0x1]
        %v1669 = vld [vmem:[%s8] sm:$0x1]
        %v1670 = vsel %vm466, %v1667, 0.0
        %1671 = vadd.xlane.f32.xlu0 %v1670
        %v1672 = vpop.xlane.xlu0 %1671
        %v1673 = vmul.f32 %v1672, %v470
        %v1674 = vsub.f32 %v1667, %v1673
        %v1675 = vmul.f32 %v1674, %v1674
        %v1676 = vsel %vm466, %v1675, 0.0
        %1677 = vadd.xlane.f32.xlu0 %v1676
        %v1678 = vpop.xlane.xlu0 %1677
        %v1679 = vmul.f32 %v1678, %v470
        %v1680 = vadd.f32 %v1679, 1e-05
        %v1681 = vrsqrt.pop %v1680
        %v1682 = vmul.f32 %v1674, %v1681
        %v1684 = vlaneseq
        %v1685 = vshrl.u32 %v1684, 7
        %v1686 = vsub.s32 0, %v1685
        %v1687 = vrot.slane %v1668, %v1686
        %v1689 = vmul.f32 %v1682, %v1687
        %v1691 = vlaneseq
        %v1692 = vshrl.u32 %v1691, 7
        %v1693 = vsub.s32 0, %v1692
        %v1694 = vrot.slane %v1669, %v1693
        %v1696 = vadd.f32 %v1689, %v1694
        %v1697 = vld [vmem:[%s9] sm:$0xf]
        %v1698 = vld [vmem:[%s9 + $0x4] sm:$0xf]
        %v1699 = vld [vmem:[%s9 + $0x8] sm:$0xf]
        %v1700 = vld [vmem:[%s9 + $0xc] sm:$0xf]
        %v1701 = vpack.c.bf16 %v1696, %v1696
        %v1702 = vld [vmem:[%s10] sm:$0x1]
        %v1704 = vlaneseq
        %v1705 = vshrl.u32 %v1704, 7
        %v1706 = vsub.s32 0, %v1705
        %v1707 = vrot.slane %v1702, %v1706
        %v1713 = vunpack.c.l.b16 %v1697
        %v1714 = vunpack.c.l.b16 %v1698
        %v1715 = vunpack.c.l.b16 %v1699
        %v1716 = vunpack.c.l.b16 %v1700
        %v1717 = vpack.c.b16 %v1714, %v1713
        %v1718 = vpack.c.b16 %v1716, %v1715
        %v1722 = vsel %vm466, %v1701, 0
        %1724 = vmatprep.subr.bf16.mxu0 0
        %1725 = vmatpush1.bf16.msra.mxu0 %v1717
        %1726 = vmatprep.subr.bf16.mxu0 0
        %1727 = vmatpush1.bf16.msra.mxu0 %v1718
        %1728 = vmatprep.subr.bf16.mxu0 0
        %1729 = vmatpush1.bf16.msra.mxu0 0
        %1730 = vmatprep.subr.bf16.mxu0 0
        %1731 = vmatpush1.bf16.msra.mxu0 0
        %1732 = vmatprep.subr.bf16.mxu0 0
        %1733 = vmatpush1.bf16.msra.mxu0 0
        %1734 = vmatprep.subr.bf16.mxu0 0
        %1735 = vmatpush1.bf16.msra.mxu0 0
        %1736 = vmatprep.subr.bf16.mxu0 0
        %1737 = vmatpush1.bf16.msra.mxu0 0
        %1738 = vmatprep.subr.bf16.mxu0 0
        %1739 = vmatpush1.bf16.msra.mxu0 0
        %1740 = vmatprep.subr.bf16.mxu0 0
        %1741 = vmatpush1.bf16.msra.mxu0 0
        %1742 = vmatprep.subr.bf16.mxu0 0
        %1743 = vmatpush1.bf16.msra.mxu0 0
        %1744 = vmatprep.subr.bf16.mxu0 0
        %1745 = vmatpush1.bf16.msra.mxu0 0
        %1746 = vmatprep.subr.bf16.mxu0 0
        %1747 = vmatpush1.bf16.msra.mxu0 0
        %1748 = vmatprep.subr.bf16.mxu0 0
        %1749 = vmatpush1.bf16.msra.mxu0 0
        %1750 = vmatprep.subr.bf16.mxu0 0
        %1751 = vmatpush1.bf16.msra.mxu0 0
        %1752 = vmatprep.subr.bf16.mxu0 0
        %1753 = vmatpush1.bf16.msra.mxu0 0
        %1754 = vmatprep.subr.bf16.mxu0 0
        %1755 = vmatpush1.bf16.msra.mxu0 0
        %1756 = vmatprep.mubr.bf16.mxu0 0
        %1757 = vmatmul.mubr.bf16.gmra.mrb[0].mxu0 %v1722
        %v1758 = vpop.f32.mrb[0].mxu0
        %v1759 = vadd.f32 %v1707, %v1758
        %v1760 = vpop.f32.mrb[0].mxu0
        %v1761 = vpop.f32.mrb[0].mxu0
        %v1762 = vpop.f32.mrb[0].mxu0
        %1763 = vdwg.mxu0
        %v1764 = vmul.f32 %v1759, 0.5
        %v1765 = vmul.f32 %v1759, 0.044715
        %v1766 = vmul.f32 %v1765, %v1759
        %v1767 = vmul.f32 %v1766, %v1759
        %v1768 = vadd.f32 %v1759, %v1767
        %v1769 = vmul.f32 %v1768, 0.7978846
        %v1770 = vtanh.pop %v1769
        %v1771 = vadd.f32 %v1770, 1.0
        %v1772 = vmul.f32 %v1764, %v1771
        %v1773 = vld [vmem:[%s11] sm:$0xf]
        %v1774 = vld [vmem:[%s11 + $0x4] sm:$0xf]
        %v1775 = vld [vmem:[%s11 + $0x8] sm:$0xf]
        %v1776 = vld [vmem:[%s11 + $0xc] sm:$0xf]
        %v1777 = vld [vmem:[%s11 + $0x10] sm:$0xf]
        %v1778 = vld [vmem:[%s11 + $0x14] sm:$0xf]
        %v1779 = vld [vmem:[%s11 + $0x18] sm:$0xf]
        %v1780 = vld [vmem:[%s11 + $0x1c] sm:$0xf]
        %v1781 = vld [vmem:[%s11 + $0x20] sm:$0xf]
        %v1782 = vld [vmem:[%s11 + $0x24] sm:$0xf]
        %v1783 = vld [vmem:[%s11 + $0x28] sm:$0xf]
        %v1784 = vld [vmem:[%s11 + $0x2c] sm:$0xf]
        %v1785 = vld [vmem:[%s11 + $0x30] sm:$0xf]
        %v1786 = vld [vmem:[%s11 + $0x34] sm:$0xf]
        %v1787 = vld [vmem:[%s11 + $0x38] sm:$0xf]
        %v1788 = vld [vmem:[%s11 + $0x3c] sm:$0xf]
        %v1789 = vpack.c.bf16 %v1772, %v1772
        %v1806 = vunpack.c.l.b16 %v1773
        %v1807 = vunpack.c.l.b16 %v1774
        %v1808 = vunpack.c.l.b16 %v1775
        %v1809 = vunpack.c.l.b16 %v1776
        %v1810 = vunpack.c.l.b16 %v1777
        %v1811 = vunpack.c.l.b16 %v1778
        %v1812 = vunpack.c.l.b16 %v1779
        %v1813 = vunpack.c.l.b16 %v1780
        %v1814 = vunpack.c.l.b16 %v1781
        %v1815 = vunpack.c.l.b16 %v1782
        %v1816 = vunpack.c.l.b16 %v1783
        %v1817 = vunpack.c.l.b16 %v1784
        %v1818 = vunpack.c.l.b16 %v1785
        %v1819 = vunpack.c.l.b16 %v1786
        %v1820 = vunpack.c.l.b16 %v1787
        %v1821 = vunpack.c.l.b16 %v1788
        %v1822 = vpack.c.b16 %v1807, %v1806
        %v1823 = vpack.c.b16 %v1809, %v1808
        %v1824 = vpack.c.b16 %v1811, %v1810
        %v1825 = vpack.c.b16 %v1813, %v1812
        %v1826 = vpack.c.b16 %v1815, %v1814
        %v1827 = vpack.c.b16 %v1817, %v1816
        %v1828 = vpack.c.b16 %v1819, %v1818
        %v1829 = vpack.c.b16 %v1821, %v1820
        %1838 = vmatprep.subr.bf16.mxu0 0
        %1839 = vmatpush1.bf16.msra.mxu0 %v1822
        %1840 = vmatprep.subr.bf16.mxu0 0
        %1841 = vmatpush1.bf16.msra.mxu0 %v1823
        %1842 = vmatprep.subr.bf16.mxu0 0
        %1843 = vmatpush1.bf16.msra.mxu0 %v1824
        %1844 = vmatprep.subr.bf16.mxu0 0
        %1845 = vmatpush1.bf16.msra.mxu0 %v1825
        %1846 = vmatprep.subr.bf16.mxu0 0
        %1847 = vmatpush1.bf16.msra.mxu0 %v1826
        %1848 = vmatprep.subr.bf16.mxu0 0
        %1849 = vmatpush1.bf16.msra.mxu0 %v1827
        %1850 = vmatprep.subr.bf16.mxu0 0
        %1851 = vmatpush1.bf16.msra.mxu0 %v1828
        %1852 = vmatprep.subr.bf16.mxu0 0
        %1853 = vmatpush1.bf16.msra.mxu0 %v1829
        %1854 = vmatprep.subr.bf16.mxu0 0
        %1855 = vmatpush1.bf16.msra.mxu0 0
        %1856 = vmatprep.subr.bf16.mxu0 0
        %1857 = vmatpush1.bf16.msra.mxu0 0
        %1858 = vmatprep.subr.bf16.mxu0 0
        %1859 = vmatpush1.bf16.msra.mxu0 0
        %1860 = vmatprep.subr.bf16.mxu0 0
        %1861 = vmatpush1.bf16.msra.mxu0 0
        %1862 = vmatprep.subr.bf16.mxu0 0
        %1863 = vmatpush1.bf16.msra.mxu0 0
        %1864 = vmatprep.subr.bf16.mxu0 0
        %1865 = vmatpush1.bf16.msra.mxu0 0
        %1866 = vmatprep.subr.bf16.mxu0 0
        %1867 = vmatpush1.bf16.msra.mxu0 0
        %1868 = vmatprep.subr.bf16.mxu0 0
        %1869 = vmatpush1.bf16.msra.mxu0 0
        %1870 = vmatprep.mubr.bf16.mxu0 0
        %1871 = vmatmul.mubr.bf16.gmra.mrb[0].mxu0 %v1789
        %v1872 = vpop.f32.mrb[0].mxu0
        %v1873 = vadd.f32 0.0, %v1872
        %v1874 = vpop.f32.mrb[0].mxu0
        %v1875 = vpop.f32.mrb[0].mxu0
        %v1876 = vpop.f32.mrb[0].mxu0
        %1877 = vdwg.mxu0
        %v1878 = vadd.f32 %v1667, %v1873
        %v1879 = vld [vmem:[%s12] sm:$0x1]
        %v1881 = vlaneseq
        %v1882 = vshrl.u32 %v1881, 7
        %v1883 = vsub.s32 0, %v1882
        %v1884 = vrot.slane %v1879, %v1883
        %v1886 = vadd.f32 %v1878, %v1884
        %1887 = vst.msk [vmem:[%s453] sm:$0xff] %vm466, %v1886
        %s1888 = sand.u32 %s329, 1
        %s1889 = scalar_lea.sflag [#allocation5], %s1888
        %s1890 = sand.u32 %s329, 1
        %s1891 = smul.addr %s1890, 8
        %s1892 = scalar_lea.vmem [#allocation4], %s1891
        // Predicated region
        $region80: #{tpu_custom_call.1} parent=71 // pred_check
          %p1893 = pneg %p339
        $region81: #{tpu_custom_call.1} parent=71 // pred_check_branch
          %1895 = sbr.rel (%p1893) target = $region83
        $region82: #{tpu_custom_call.1} parent=71 // pred_region
          %s1897 = ssub.s32 128, 128
          %1898 = vsyncadd %s1889, %s1897
          %s1899 = sadd.s32 %s32, %s31
          %s1900 = smul.addr %s1899, 128
          %s1901 = scalar_lea.hbm %s13, %s1900
          %s1903 = sshll.u32 %s1892, 4
          %s1904 = int_to_ptr.vmem [resolvable:$true] %s1903
          %1906 = dma.vmem_to_hbm [thread:$0]  %s1904, 128, %s1901, %s1889
        $region83: #{tpu_custom_call.1} parent=71 // pred_fallthru
          _
      $region72: #{tpu_custom_call.1} parent=5 // pred_fallthru
        _
      %p1907 = scmp.le.s32.totalorder 2, %s22
      // Predicated region
      $region84: #{tpu_custom_call.1} parent=5 // pred_check
        %p1908 = pneg %p1907
      $region85: #{tpu_custom_call.1} parent=5 // pred_check_branch
        %1910 = sbr.rel (%p1908) target = $region87
      $region86: #{tpu_custom_call.1} parent=5 // pred_region
        %s1911 = ssub.s32 %s22, 2
        // Predicated region
        $region88: #{tpu_custom_call.1} parent=86 // pred_check
          %p1912 = pneg %p345
        $region89: #{tpu_custom_call.1} parent=86 // pred_check_branch
          %1914 = sbr.rel (%p1912) target = $region91
        $region90: #{tpu_custom_call.1} parent=86 // pred_region
          %s1915 = sand.u32 %s330, 1
          %s1916 = scalar_lea.sflag [#allocation5], %s1915
          %s1917 = sand.u32 %s330, 1
          %s1918 = smul.addr %s1917, 8
          %s1919 = scalar_lea.vmem [#allocation4], %s1918
          %1920 = dma.done %s1916, 128
        $region91: #{tpu_custom_call.1} parent=86 // pred_fallthru
          _
      $region87: #{tpu_custom_call.1} parent=5 // pred_fallthru
        _
    $region6: #{tpu_custom_call.1} parent=1 // loop_footer
      %s26 = sadd.s32 1, %s22
    $region7: #{tpu_custom_call.1} parent=1 // loop_footer_branch
      %21 = sbr.rel target = $region3
    $region8: #{tpu_custom_call.1} parent=1 // loop_exit
      _
    %1921 = vsyncpa [#allocation5], 1
    %s1922 = scalar_lea.sflag [#allocation5], 1
    %1923 = vsyncpa %s1922, 1

</llo_original>
